<compile_context>
chip_gen: v6e
topology: v6e:2x2x1
jax: 0.10.0
libtpu: 0.0.40
codegen_flags: <defaults>
</compile_context>

<pallas_src>
import functools

import numpy as np
import jax
import jax.numpy as jnp
from jax.experimental import pallas as pl

LANE = 128  # lane width of the padded output slab


# ------------------------------ Pallas kernel -------------------------------


def fused_actor_critic_kernel(
        x_ref,       # (T*Np, F)   time-major padded observations (row t*Np+n)
        h0_ref,      # (Np, H)     initial hidden state (padded to sublane tile)
        wih_ref,     # (F, 3H)     packed per-gate input weights  [r | z | n]
        whh_ref,     # (H, 3H)     packed per-gate hidden weights [r | z | n]
        whid_ref,    # (H, HID)    lin_hidden
        wpv_ref,     # (HID, 2HID) packed [lin_policy | lin_value]
        wfin_ref,    # (2HID, 128) block-diag [policy ; value] at lanes [0:A],[A]
        bias_ref,    # (8, 128)    bias slab (see wrapper for layout)
        out_ref,     # (T*Np, 128) lane-dense slab: [pi (A) | value (1) | zeros]
        hlast_ref,   # (Np, H)     final recurrent cell
        *, action_dim):
    B = x_ref.shape[0]
    Np, H = h0_ref.shape
    T = B // Np
    HID = whid_ref.shape[1]
    HID2 = wpv_ref.shape[1]

    def dot(a, b):
        return jnp.dot(a, b, preferred_element_type=jnp.float32)

    def sigmoid(x):
        # Single EUP tanh per gate pack instead of exp + divide on the serial chain.
        return 0.5 * (jnp.tanh(0.5 * x) + 1.0)

    # ---- one load of the bias slab; static sub-slices (prologue only) -------
    bias = bias_ref[...]
    gi_bias = bias[0:1, 0:3 * H]       # [b_ih_r+b_hh_r | b_ih_z+b_hh_z | b_ih_n]
    bhh_n = bias[1:2, 0:H]             # b_hh_n (stays inside r*(...))
    b_hid = bias[2:3, 0:HID]
    b_pv = bias[3:4, 0:HID2]
    b_fin = bias[4:5, :]               # [b_pi | b_v | zeros], full 128 lanes

    # ---- hoisted input projection for ALL rows & gates: one MXU matmul ------
    gi = dot(x_ref[...], wih_ref[...]) + gi_bias        # (B, 3H)
    gi_rz = gi[:, 0:2 * H]                              # lane slice hoisted out
    gi_n = gi[:, 2 * H:3 * H]                           # of the recurrence loop

    whh = whh_ref[...]                                  # (H, 3H)

    # ---- recurrence: ONE MXU push + VPU/EUP work per step --------------------
    h = h0_ref[...]                                     # (Np, H)
    hs = []
    for t in range(T):                                  # static, fully unrolled
        lo = t * Np                                     # sublane-tile aligned
        ghh = dot(h, whh)                               # (Np, 3H)
        rz = sigmoid(gi_rz[lo:lo + Np, :] + ghh[:, 0:2 * H])
        r = rz[:, 0:H]                                  # lane offset 0, no shift
        z = rz[:, H:2 * H]                              # XLU lane shift (idle slot)
        n = jnp.tanh(gi_n[lo:lo + Np, :] + r * (ghh[:, 2 * H:3 * H] + bhh_n))
        h = (1.0 - z) * n + z * h
        hs.append(h)

    hlast_ref[...] = h                                  # written exactly once

    # ---- fused MLP heads on all rows (time-major; heads are row-wise) --------
    h_all = jnp.concatenate(hs, axis=0)                 # (B, H), no VMEM scratch
    hd = jnp.tanh(dot(h_all, whid_ref[...]) + b_hid)    # lin_hidden
    hpv = jnp.tanh(dot(hd, wpv_ref[...]) + b_pv)        # [h_policy | h_value]
    fin = dot(hpv, wfin_ref[...]) + b_fin               # (B, 128): [pi|value|0]
    # TODO(synk): training-mode MultivariateNormal(mu, cov_mat) distribution
    # object has no Pallas equivalent; the eval-mode branch tanh(policy(...)) is
    # what this kernel implements.
    lane = jax.lax.broadcasted_iota(jnp.int32, fin.shape, dimension=1)
    out_ref[...] = jnp.where(lane < action_dim, jnp.tanh(fin), fin)


# ------------------------------ host wrapper --------------------------------


@functools.partial(jax.jit, static_argnames=("sequence_len",))
def actor_critic_forward(obs, hxs, params, sequence_len):
    """obs: (B, F) float32, hxs: (1, N, H) with N = B // sequence_len."""
    B, F = obs.shape
    T = sequence_len
    N = B // T
    H = hxs.shape[-1]
    HID = params["w_hid"].shape[-1]
    A = params["w_pi"].shape[-1]

    # Pad N to a sublane tile so every per-step slice inside the kernel is
    # tile-aligned; padded rows are stripped on the way out.
    Np = max(8, ((N + 7) // 8) * 8)
    pad = Np - N

    # batch-major (row n*T+t) -> time-major (row t*Np+n); tiny XLA reshuffle.
    x = obs.reshape(N, T, F)
    h0 = hxs[0]
    if pad:
        x = jnp.concatenate([x, jnp.zeros((pad, T, F), obs.dtype)], axis=0)
        h0 = jnp.concatenate([h0, jnp.zeros((pad, H), h0.dtype)], axis=0)
    x_tm = jnp.transpose(x, (1, 0, 2)).reshape(T * Np, F)

    # ---- pack GRU weights along output lanes: (3,F,H)->(F,3H), (3,H,H)->(H,3H)
    w_ih = jnp.concatenate([params["w_ih"][g] for g in range(3)], axis=1)
    w_hh = jnp.concatenate([params["w_hh"][g] for g in range(3)], axis=1)

    # ---- pack head weights: [lin_policy|lin_value], block-diag [policy;value]
    w_pv = jnp.concatenate([params["w_pol"], params["w_val"]], axis=1)  # (HID,2HID)
    w_fin = jnp.zeros((2 * HID, LANE), jnp.float32)
    w_fin = w_fin.at[0:HID, 0:A].set(params["w_pi"])
    w_fin = w_fin.at[HID:2 * HID, A:A + 1].set(params["w_v"])

    # ---- single (8, 128) bias slab: one operand for ALL biases ---------------
    gi_bias = jnp.concatenate([
        params["b_ih"][0] + params["b_hh"][0],     # r: fold b_hh
        params["b_ih"][1] + params["b_hh"][1],     # z: fold b_hh
        params["b_ih"][2]], axis=1)                # n: b_hh_n stays in r*(...)
    bias = jnp.zeros((8, LANE), jnp.float32)
    bias = bias.at[0:1, 0:3 * H].set(gi_bias)
    bias = bias.at[1:2, 0:H].set(params["b_hh"][2])
    bias = bias.at[2:3, 0:HID].set(params["b_hid"])
    bias = bias.at[3:4, 0:2 * HID].set(
        jnp.concatenate([params["b_pol"], params["b_val"]], axis=1))
    bias = bias.at[4:5, 0:A].set(params["b_pi"])
    bias = bias.at[4:5, A:A + 1].set(params["b_v"])

    slab, h_last = pl.pallas_call(
        functools.partial(fused_actor_critic_kernel, action_dim=A),
        out_shape=(jax.ShapeDtypeStruct((T * Np, LANE), jnp.float32),
                   jax.ShapeDtypeStruct((Np, H), jnp.float32)),
    )(x_tm, h0, w_ih, w_hh, params["w_hid"], w_pv, w_fin, bias)

    # time-major padded -> batch-major unpadded (tiny row gather, fused by XLA).
    slab_bm = jnp.transpose(
        slab.reshape(T, Np, LANE)[:, :N, :], (1, 0, 2)).reshape(B, LANE)
    pi = slab_bm[:, :A]
    value = slab_bm[:, A]
    return pi, value, h_last[:N][None]        # recurrent_cell: (1, N, H)


# --------------------------- parameter construction -------------------------


def orthogonal(key, shape, gain):
    """Matches torch.nn.init.orthogonal_ semantics for 2D weights."""
    rows, cols = shape
    a = jax.random.normal(
        key, (rows, cols) if rows >= cols else (cols, rows), dtype=jnp.float32)
    q, r = jnp.linalg.qr(a)
    q = q * jnp.sign(jnp.diag(r))
    if rows < cols:
        q = q.T
    return (gain * q).astype(jnp.float32)


def uniform_bias(key, fan_in, size):
    bound = 1.0 / np.sqrt(float(fan_in))
    return jax.random.uniform(key, (1, size), jnp.float32, -bound, bound)


def make_params(key, in_features, rnn_hidden, hidden_size, action_dim):
    ks = jax.random.split(key, 12)
    g2 = float(np.sqrt(2.0))
    H = rnn_hidden
    # GRU (PyTorch shapes: weight_ih (3H, F), weight_hh (3H, H), gate order
    # [r, z, n]; orthogonal init on the whole matrices, zero biases).
    w_ih = orthogonal(ks[0], (3 * H, in_features), g2)
    w_hh = orthogonal(ks[1], (3 * H, H), g2)
    # Split per gate and pre-transpose to (in, out); stack as (3, in, out).
    w_ih_g = jnp.stack([w_ih[g * H:(g + 1) * H, :].T for g in range(3)])
    w_hh_g = jnp.stack([w_hh[g * H:(g + 1) * H, :].T for g in range(3)])
    # Linear layers (PyTorch weight (out, in); stored transposed (in, out)).
    w_hid = orthogonal(ks[2], (hidden_size, rnn_hidden), g2)
    w_pol = orthogonal(ks[3], (hidden_size, hidden_size), g2)
    w_val = orthogonal(ks[4], (hidden_size, hidden_size), g2)
    w_pi = orthogonal(ks[5], (action_dim, hidden_size), float(np.sqrt(0.01)))
    w_v = orthogonal(ks[6], (1, hidden_size), 1.0)
    return {
        "w_ih": w_ih_g, "w_hh": w_hh_g,
        "b_ih": jnp.zeros((3, 1, H), jnp.float32),
        "b_hh": jnp.zeros((3, 1, H), jnp.float32),
        "w_hid": w_hid.T, "b_hid": uniform_bias(ks[7], rnn_hidden, hidden_size),
        "w_pol": w_pol.T, "b_pol": uniform_bias(ks[8], hidden_size, hidden_size),
        "w_val": w_val.T, "b_val": uniform_bias(ks[9], hidden_size, hidden_size),
        "w_pi": w_pi.T, "b_pi": uniform_bias(ks[10], hidden_size, action_dim),
        "w_v": w_v.T, "b_v": uniform_bias(ks[11], hidden_size, 1),
    }


# ------------------------------ pure-JAX reference ---------------------------


def ref_forward(obs, hxs, p, T):
    B, F = obs.shape
    N = B // T
    H = hxs.shape[-1]
    x = obs.reshape(N, T, F)
    h = hxs[0]
    outs = []
    for t in range(T):
        x_t = x[:, t, :]
        r = jax.nn.sigmoid(x_t @ p["w_ih"][0] + p["b_ih"][0]
                           + h @ p["w_hh"][0] + p["b_hh"][0])
        z = jax.nn.sigmoid(x_t @ p["w_ih"][1] + p["b_ih"][1]
                           + h @ p["w_hh"][1] + p["b_hh"][1])
        n = jnp.tanh(x_t @ p["w_ih"][2] + p["b_ih"][2]
                     + r * (h @ p["w_hh"][2] + p["b_hh"][2]))
        h = (1.0 - z) * n + z * h
        outs.append(h)
    h_all = jnp.stack(outs, axis=1).reshape(B, H)
    hd = jnp.tanh(h_all @ p["w_hid"] + p["b_hid"])
    hp = jnp.tanh(hd @ p["w_pol"] + p["b_pol"])
    hv = jnp.tanh(hd @ p["w_val"] + p["b_val"])
    pi = jnp.tanh(hp @ p["w_pi"] + p["b_pi"])
    value = (hv @ p["w_v"] + p["b_v"]).reshape(-1)
    return pi, value, h[None]


# ----------------------------------- main ------------------------------------

if __name__ == "__main__":
    # Config: in_feature_size=16, hidden_state_size=32, hidden_layer_size=32,
    # action_dim=4, layer_type='gru', sequence_len=8, num_sequences=4.
    IN_FEATURES = 16
    RNN_HIDDEN = 32
    HIDDEN = 32
    ACTION_DIM = 4
    SEQ_LEN = 8
    NUM_SEQ = 4
    BATCH = NUM_SEQ * SEQ_LEN

    key = jax.random.PRNGKey(0)
    k_obs, k_params = jax.random.split(key)

    obs = jax.random.normal(k_obs, (BATCH, IN_FEATURES), dtype=jnp.float32)
    # init_recurrent_cell_states(num_sequences) -> (1, N, H) zeros, cxs=None.
    hxs = jnp.zeros((1, NUM_SEQ, RNN_HIDDEN), dtype=jnp.float32)
    params = make_params(k_params, IN_FEATURES, RNN_HIDDEN, HIDDEN, ACTION_DIM)

    pi, value, rc = actor_critic_forward(obs, hxs, params, sequence_len=SEQ_LEN)
    jax.block_until_ready((pi, value, rc))

    pi_r, value_r, rc_r = ref_forward(obs, hxs, params, SEQ_LEN)
    assert pi.shape == (BATCH, ACTION_DIM)
    assert value.shape == (BATCH,)
    assert rc.shape == (1, NUM_SEQ, RNN_HIDDEN)
    assert jnp.allclose(pi, pi_r, atol=1e-5, rtol=1e-5)
    assert jnp.allclose(value, value_r, atol=1e-5, rtol=1e-5)
    assert jnp.allclose(rc, rc_r, atol=1e-5, rtol=1e-5)

    print("KERNEL_OK")
</pallas_src>

<mosaic_0001>
module attributes {stable_mosaic.version = 11 : i64} {
  func.func @fused_actor_critic_kernel(%arg0: memref<64x16xf32, #tpu.memory_space<vmem>>, %arg1: memref<8x32xf32, #tpu.memory_space<vmem>>, %arg2: memref<16x96xf32, #tpu.memory_space<vmem>>, %arg3: memref<32x96xf32, #tpu.memory_space<vmem>>, %arg4: memref<32x32xf32, #tpu.memory_space<vmem>>, %arg5: memref<32x64xf32, #tpu.memory_space<vmem>>, %arg6: memref<64x128xf32, #tpu.memory_space<vmem>>, %arg7: memref<8x128xf32, #tpu.memory_space<vmem>>, %arg8: memref<64x128xf32, #tpu.memory_space<vmem>>, %arg9: memref<8x32xf32, #tpu.memory_space<vmem>>) attributes {dimension_semantics = [], scalar_prefetch = 0 : i64, scratch_operands = 0 : i64, tpu.core_type = #tpu.core_type<tc>} {
    %c0 = arith.constant 0 : index
    %c0_0 = arith.constant 0 : index
    %0 = vector.load %arg7[%c0, %c0_0] : memref<8x128xf32, #tpu.memory_space<vmem>>, vector<8x128xf32>
    %1 = vector.extract_strided_slice %0 {offsets = [0, 0], sizes = [1, 96], strides = [1, 1]} : vector<8x128xf32> to vector<1x96xf32>
    %2 = vector.extract_strided_slice %0 {offsets = [1, 0], sizes = [1, 32], strides = [1, 1]} : vector<8x128xf32> to vector<1x32xf32>
    %3 = vector.extract_strided_slice %0 {offsets = [2, 0], sizes = [1, 32], strides = [1, 1]} : vector<8x128xf32> to vector<1x32xf32>
    %4 = vector.extract_strided_slice %0 {offsets = [3, 0], sizes = [1, 64], strides = [1, 1]} : vector<8x128xf32> to vector<1x64xf32>
    %5 = vector.extract_strided_slice %0 {offsets = [4, 0], sizes = [1, 128], strides = [1, 1]} : vector<8x128xf32> to vector<1x128xf32>
    %c0_1 = arith.constant 0 : index
    %c0_2 = arith.constant 0 : index
    %6 = vector.load %arg0[%c0_1, %c0_2] : memref<64x16xf32, #tpu.memory_space<vmem>>, vector<64x16xf32>
    %c0_3 = arith.constant 0 : index
    %c0_4 = arith.constant 0 : index
    %7 = vector.load %arg2[%c0_3, %c0_4] : memref<16x96xf32, #tpu.memory_space<vmem>>, vector<16x96xf32>
    %cst = arith.constant dense<0.000000e+00> : vector<64x96xf32>
    %8 = tpu.matmul %6, %7, %cst {dimension_numbers = #tpu.dot_dimension_numbers<[1], [0], [0], [1], [0, 0, 1, 1], [], []>} : vector<64x16xf32>, vector<16x96xf32>, vector<64x96xf32> -> vector<64x96xf32>
    %9 = vector.broadcast %1 : vector<1x96xf32> to vector<64x96xf32>
    %10 = arith.addf %8, %9 : vector<64x96xf32>
    %11 = vector.extract_strided_slice %10 {offsets = [0, 0], sizes = [64, 64], strides = [1, 1]} : vector<64x96xf32> to vector<64x64xf32>
    %12 = vector.extract_strided_slice %10 {offsets = [0, 64], sizes = [64, 32], strides = [1, 1]} : vector<64x96xf32> to vector<64x32xf32>
    %c0_5 = arith.constant 0 : index
    %c0_6 = arith.constant 0 : index
    %13 = vector.load %arg3[%c0_5, %c0_6] : memref<32x96xf32, #tpu.memory_space<vmem>>, vector<32x96xf32>
    %c0_7 = arith.constant 0 : index
    %c0_8 = arith.constant 0 : index
    %14 = vector.load %arg1[%c0_7, %c0_8] : memref<8x32xf32, #tpu.memory_space<vmem>>, vector<8x32xf32>
    %cst_9 = arith.constant dense<0.000000e+00> : vector<8x96xf32>
    %15 = tpu.matmul %14, %13, %cst_9 {dimension_numbers = #tpu.dot_dimension_numbers<[1], [0], [0], [1], [0, 0, 1, 1], [], []>} : vector<8x32xf32>, vector<32x96xf32>, vector<8x96xf32> -> vector<8x96xf32>
    %16 = vector.extract_strided_slice %11 {offsets = [0, 0], sizes = [8, 64], strides = [1, 1]} : vector<64x64xf32> to vector<8x64xf32>
    %17 = vector.extract_strided_slice %15 {offsets = [0, 0], sizes = [8, 64], strides = [1, 1]} : vector<8x96xf32> to vector<8x64xf32>
    %18 = arith.addf %16, %17 : vector<8x64xf32>
    %cst_10 = arith.constant 5.000000e-01 : f32
    %19 = vector.broadcast %cst_10 : f32 to vector<8x64xf32>
    %20 = arith.mulf %19, %18 : vector<8x64xf32>
    %21 = math.tanh %20 : vector<8x64xf32>
    %cst_11 = arith.constant 1.000000e+00 : f32
    %22 = vector.broadcast %cst_11 : f32 to vector<8x64xf32>
    %23 = arith.addf %21, %22 : vector<8x64xf32>
    %cst_12 = arith.constant 5.000000e-01 : f32
    %24 = vector.broadcast %cst_12 : f32 to vector<8x64xf32>
    %25 = arith.mulf %24, %23 : vector<8x64xf32>
    %26 = vector.extract_strided_slice %25 {offsets = [0, 0], sizes = [8, 32], strides = [1, 1]} : vector<8x64xf32> to vector<8x32xf32>
    %27 = vector.extract_strided_slice %25 {offsets = [0, 32], sizes = [8, 32], strides = [1, 1]} : vector<8x64xf32> to vector<8x32xf32>
    %28 = vector.extract_strided_slice %12 {offsets = [0, 0], sizes = [8, 32], strides = [1, 1]} : vector<64x32xf32> to vector<8x32xf32>
    %29 = vector.extract_strided_slice %15 {offsets = [0, 64], sizes = [8, 32], strides = [1, 1]} : vector<8x96xf32> to vector<8x32xf32>
    %30 = vector.broadcast %2 : vector<1x32xf32> to vector<8x32xf32>
    %31 = arith.addf %29, %30 : vector<8x32xf32>
    %32 = arith.mulf %26, %31 : vector<8x32xf32>
    %33 = arith.addf %28, %32 : vector<8x32xf32>
    %34 = math.tanh %33 : vector<8x32xf32>
    %cst_13 = arith.constant 1.000000e+00 : f32
    %35 = vector.broadcast %cst_13 : f32 to vector<8x32xf32>
    %36 = arith.subf %35, %27 : vector<8x32xf32>
    %37 = arith.mulf %36, %34 : vector<8x32xf32>
    %38 = arith.mulf %27, %14 : vector<8x32xf32>
    %39 = arith.addf %37, %38 : vector<8x32xf32>
    %cst_14 = arith.constant dense<0.000000e+00> : vector<8x96xf32>
    %40 = tpu.matmul %39, %13, %cst_14 {dimension_numbers = #tpu.dot_dimension_numbers<[1], [0], [0], [1], [0, 0, 1, 1], [], []>} : vector<8x32xf32>, vector<32x96xf32>, vector<8x96xf32> -> vector<8x96xf32>
    %41 = vector.extract_strided_slice %11 {offsets = [8, 0], sizes = [8, 64], strides = [1, 1]} : vector<64x64xf32> to vector<8x64xf32>
    %42 = vector.extract_strided_slice %40 {offsets = [0, 0], sizes = [8, 64], strides = [1, 1]} : vector<8x96xf32> to vector<8x64xf32>
    %43 = arith.addf %41, %42 : vector<8x64xf32>
    %cst_15 = arith.constant 5.000000e-01 : f32
    %44 = vector.broadcast %cst_15 : f32 to vector<8x64xf32>
    %45 = arith.mulf %44, %43 : vector<8x64xf32>
    %46 = math.tanh %45 : vector<8x64xf32>
    %cst_16 = arith.constant 1.000000e+00 : f32
    %47 = vector.broadcast %cst_16 : f32 to vector<8x64xf32>
    %48 = arith.addf %46, %47 : vector<8x64xf32>
    %cst_17 = arith.constant 5.000000e-01 : f32
    %49 = vector.broadcast %cst_17 : f32 to vector<8x64xf32>
    %50 = arith.mulf %49, %48 : vector<8x64xf32>
    %51 = vector.extract_strided_slice %50 {offsets = [0, 0], sizes = [8, 32], strides = [1, 1]} : vector<8x64xf32> to vector<8x32xf32>
    %52 = vector.extract_strided_slice %50 {offsets = [0, 32], sizes = [8, 32], strides = [1, 1]} : vector<8x64xf32> to vector<8x32xf32>
    %53 = vector.extract_strided_slice %12 {offsets = [8, 0], sizes = [8, 32], strides = [1, 1]} : vector<64x32xf32> to vector<8x32xf32>
    %54 = vector.extract_strided_slice %40 {offsets = [0, 64], sizes = [8, 32], strides = [1, 1]} : vector<8x96xf32> to vector<8x32xf32>
    %55 = vector.broadcast %2 : vector<1x32xf32> to vector<8x32xf32>
    %56 = arith.addf %54, %55 : vector<8x32xf32>
    %57 = arith.mulf %51, %56 : vector<8x32xf32>
    %58 = arith.addf %53, %57 : vector<8x32xf32>
    %59 = math.tanh %58 : vector<8x32xf32>
    %cst_18 = arith.constant 1.000000e+00 : f32
    %60 = vector.broadcast %cst_18 : f32 to vector<8x32xf32>
    %61 = arith.subf %60, %52 : vector<8x32xf32>
    %62 = arith.mulf %61, %59 : vector<8x32xf32>
    %63 = arith.mulf %52, %39 : vector<8x32xf32>
    %64 = arith.addf %62, %63 : vector<8x32xf32>
    %cst_19 = arith.constant dense<0.000000e+00> : vector<8x96xf32>
    %65 = tpu.matmul %64, %13, %cst_19 {dimension_numbers = #tpu.dot_dimension_numbers<[1], [0], [0], [1], [0, 0, 1, 1], [], []>} : vector<8x32xf32>, vector<32x96xf32>, vector<8x96xf32> -> vector<8x96xf32>
    %66 = vector.extract_strided_slice %11 {offsets = [16, 0], sizes = [8, 64], strides = [1, 1]} : vector<64x64xf32> to vector<8x64xf32>
    %67 = vector.extract_strided_slice %65 {offsets = [0, 0], sizes = [8, 64], strides = [1, 1]} : vector<8x96xf32> to vector<8x64xf32>
    %68 = arith.addf %66, %67 : vector<8x64xf32>
    %cst_20 = arith.constant 5.000000e-01 : f32
    %69 = vector.broadcast %cst_20 : f32 to vector<8x64xf32>
    %70 = arith.mulf %69, %68 : vector<8x64xf32>
    %71 = math.tanh %70 : vector<8x64xf32>
    %cst_21 = arith.constant 1.000000e+00 : f32
    %72 = vector.broadcast %cst_21 : f32 to vector<8x64xf32>
    %73 = arith.addf %71, %72 : vector<8x64xf32>
    %cst_22 = arith.constant 5.000000e-01 : f32
    %74 = vector.broadcast %cst_22 : f32 to vector<8x64xf32>
    %75 = arith.mulf %74, %73 : vector<8x64xf32>
    %76 = vector.extract_strided_slice %75 {offsets = [0, 0], sizes = [8, 32], strides = [1, 1]} : vector<8x64xf32> to vector<8x32xf32>
    %77 = vector.extract_strided_slice %75 {offsets = [0, 32], sizes = [8, 32], strides = [1, 1]} : vector<8x64xf32> to vector<8x32xf32>
    %78 = vector.extract_strided_slice %12 {offsets = [16, 0], sizes = [8, 32], strides = [1, 1]} : vector<64x32xf32> to vector<8x32xf32>
    %79 = vector.extract_strided_slice %65 {offsets = [0, 64], sizes = [8, 32], strides = [1, 1]} : vector<8x96xf32> to vector<8x32xf32>
    %80 = vector.broadcast %2 : vector<1x32xf32> to vector<8x32xf32>
    %81 = arith.addf %79, %80 : vector<8x32xf32>
    %82 = arith.mulf %76, %81 : vector<8x32xf32>
    %83 = arith.addf %78, %82 : vector<8x32xf32>
    %84 = math.tanh %83 : vector<8x32xf32>
    %cst_23 = arith.constant 1.000000e+00 : f32
    %85 = vector.broadcast %cst_23 : f32 to vector<8x32xf32>
    %86 = arith.subf %85, %77 : vector<8x32xf32>
    %87 = arith.mulf %86, %84 : vector<8x32xf32>
    %88 = arith.mulf %77, %64 : vector<8x32xf32>
    %89 = arith.addf %87, %88 : vector<8x32xf32>
    %cst_24 = arith.constant dense<0.000000e+00> : vector<8x96xf32>
    %90 = tpu.matmul %89, %13, %cst_24 {dimension_numbers = #tpu.dot_dimension_numbers<[1], [0], [0], [1], [0, 0, 1, 1], [], []>} : vector<8x32xf32>, vector<32x96xf32>, vector<8x96xf32> -> vector<8x96xf32>
    %91 = vector.extract_strided_slice %11 {offsets = [24, 0], sizes = [8, 64], strides = [1, 1]} : vector<64x64xf32> to vector<8x64xf32>
    %92 = vector.extract_strided_slice %90 {offsets = [0, 0], sizes = [8, 64], strides = [1, 1]} : vector<8x96xf32> to vector<8x64xf32>
    %93 = arith.addf %91, %92 : vector<8x64xf32>
    %cst_25 = arith.constant 5.000000e-01 : f32
    %94 = vector.broadcast %cst_25 : f32 to vector<8x64xf32>
    %95 = arith.mulf %94, %93 : vector<8x64xf32>
    %96 = math.tanh %95 : vector<8x64xf32>
    %cst_26 = arith.constant 1.000000e+00 : f32
    %97 = vector.broadcast %cst_26 : f32 to vector<8x64xf32>
    %98 = arith.addf %96, %97 : vector<8x64xf32>
    %cst_27 = arith.constant 5.000000e-01 : f32
    %99 = vector.broadcast %cst_27 : f32 to vector<8x64xf32>
    %100 = arith.mulf %99, %98 : vector<8x64xf32>
    %101 = vector.extract_strided_slice %100 {offsets = [0, 0], sizes = [8, 32], strides = [1, 1]} : vector<8x64xf32> to vector<8x32xf32>
    %102 = vector.extract_strided_slice %100 {offsets = [0, 32], sizes = [8, 32], strides = [1, 1]} : vector<8x64xf32> to vector<8x32xf32>
    %103 = vector.extract_strided_slice %12 {offsets = [24, 0], sizes = [8, 32], strides = [1, 1]} : vector<64x32xf32> to vector<8x32xf32>
    %104 = vector.extract_strided_slice %90 {offsets = [0, 64], sizes = [8, 32], strides = [1, 1]} : vector<8x96xf32> to vector<8x32xf32>
    %105 = vector.broadcast %2 : vector<1x32xf32> to vector<8x32xf32>
    %106 = arith.addf %104, %105 : vector<8x32xf32>
    %107 = arith.mulf %101, %106 : vector<8x32xf32>
    %108 = arith.addf %103, %107 : vector<8x32xf32>
    %109 = math.tanh %108 : vector<8x32xf32>
    %cst_28 = arith.constant 1.000000e+00 : f32
    %110 = vector.broadcast %cst_28 : f32 to vector<8x32xf32>
    %111 = arith.subf %110, %102 : vector<8x32xf32>
    %112 = arith.mulf %111, %109 : vector<8x32xf32>
    %113 = arith.mulf %102, %89 : vector<8x32xf32>
    %114 = arith.addf %112, %113 : vector<8x32xf32>
    %cst_29 = arith.constant dense<0.000000e+00> : vector<8x96xf32>
    %115 = tpu.matmul %114, %13, %cst_29 {dimension_numbers = #tpu.dot_dimension_numbers<[1], [0], [0], [1], [0, 0, 1, 1], [], []>} : vector<8x32xf32>, vector<32x96xf32>, vector<8x96xf32> -> vector<8x96xf32>
    %116 = vector.extract_strided_slice %11 {offsets = [32, 0], sizes = [8, 64], strides = [1, 1]} : vector<64x64xf32> to vector<8x64xf32>
    %117 = vector.extract_strided_slice %115 {offsets = [0, 0], sizes = [8, 64], strides = [1, 1]} : vector<8x96xf32> to vector<8x64xf32>
    %118 = arith.addf %116, %117 : vector<8x64xf32>
    %cst_30 = arith.constant 5.000000e-01 : f32
    %119 = vector.broadcast %cst_30 : f32 to vector<8x64xf32>
    %120 = arith.mulf %119, %118 : vector<8x64xf32>
    %121 = math.tanh %120 : vector<8x64xf32>
    %cst_31 = arith.constant 1.000000e+00 : f32
    %122 = vector.broadcast %cst_31 : f32 to vector<8x64xf32>
    %123 = arith.addf %121, %122 : vector<8x64xf32>
    %cst_32 = arith.constant 5.000000e-01 : f32
    %124 = vector.broadcast %cst_32 : f32 to vector<8x64xf32>
    %125 = arith.mulf %124, %123 : vector<8x64xf32>
    %126 = vector.extract_strided_slice %125 {offsets = [0, 0], sizes = [8, 32], strides = [1, 1]} : vector<8x64xf32> to vector<8x32xf32>
    %127 = vector.extract_strided_slice %125 {offsets = [0, 32], sizes = [8, 32], strides = [1, 1]} : vector<8x64xf32> to vector<8x32xf32>
    %128 = vector.extract_strided_slice %12 {offsets = [32, 0], sizes = [8, 32], strides = [1, 1]} : vector<64x32xf32> to vector<8x32xf32>
    %129 = vector.extract_strided_slice %115 {offsets = [0, 64], sizes = [8, 32], strides = [1, 1]} : vector<8x96xf32> to vector<8x32xf32>
    %130 = vector.broadcast %2 : vector<1x32xf32> to vector<8x32xf32>
    %131 = arith.addf %129, %130 : vector<8x32xf32>
    %132 = arith.mulf %126, %131 : vector<8x32xf32>
    %133 = arith.addf %128, %132 : vector<8x32xf32>
    %134 = math.tanh %133 : vector<8x32xf32>
    %cst_33 = arith.constant 1.000000e+00 : f32
    %135 = vector.broadcast %cst_33 : f32 to vector<8x32xf32>
    %136 = arith.subf %135, %127 : vector<8x32xf32>
    %137 = arith.mulf %136, %134 : vector<8x32xf32>
    %138 = arith.mulf %127, %114 : vector<8x32xf32>
    %139 = arith.addf %137, %138 : vector<8x32xf32>
    %cst_34 = arith.constant dense<0.000000e+00> : vector<8x96xf32>
    %140 = tpu.matmul %139, %13, %cst_34 {dimension_numbers = #tpu.dot_dimension_numbers<[1], [0], [0], [1], [0, 0, 1, 1], [], []>} : vector<8x32xf32>, vector<32x96xf32>, vector<8x96xf32> -> vector<8x96xf32>
    %141 = vector.extract_strided_slice %11 {offsets = [40, 0], sizes = [8, 64], strides = [1, 1]} : vector<64x64xf32> to vector<8x64xf32>
    %142 = vector.extract_strided_slice %140 {offsets = [0, 0], sizes = [8, 64], strides = [1, 1]} : vector<8x96xf32> to vector<8x64xf32>
    %143 = arith.addf %141, %142 : vector<8x64xf32>
    %cst_35 = arith.constant 5.000000e-01 : f32
    %144 = vector.broadcast %cst_35 : f32 to vector<8x64xf32>
    %145 = arith.mulf %144, %143 : vector<8x64xf32>
    %146 = math.tanh %145 : vector<8x64xf32>
    %cst_36 = arith.constant 1.000000e+00 : f32
    %147 = vector.broadcast %cst_36 : f32 to vector<8x64xf32>
    %148 = arith.addf %146, %147 : vector<8x64xf32>
    %cst_37 = arith.constant 5.000000e-01 : f32
    %149 = vector.broadcast %cst_37 : f32 to vector<8x64xf32>
    %150 = arith.mulf %149, %148 : vector<8x64xf32>
    %151 = vector.extract_strided_slice %150 {offsets = [0, 0], sizes = [8, 32], strides = [1, 1]} : vector<8x64xf32> to vector<8x32xf32>
    %152 = vector.extract_strided_slice %150 {offsets = [0, 32], sizes = [8, 32], strides = [1, 1]} : vector<8x64xf32> to vector<8x32xf32>
    %153 = vector.extract_strided_slice %12 {offsets = [40, 0], sizes = [8, 32], strides = [1, 1]} : vector<64x32xf32> to vector<8x32xf32>
    %154 = vector.extract_strided_slice %140 {offsets = [0, 64], sizes = [8, 32], strides = [1, 1]} : vector<8x96xf32> to vector<8x32xf32>
    %155 = vector.broadcast %2 : vector<1x32xf32> to vector<8x32xf32>
    %156 = arith.addf %154, %155 : vector<8x32xf32>
    %157 = arith.mulf %151, %156 : vector<8x32xf32>
    %158 = arith.addf %153, %157 : vector<8x32xf32>
    %159 = math.tanh %158 : vector<8x32xf32>
    %cst_38 = arith.constant 1.000000e+00 : f32
    %160 = vector.broadcast %cst_38 : f32 to vector<8x32xf32>
    %161 = arith.subf %160, %152 : vector<8x32xf32>
    %162 = arith.mulf %161, %159 : vector<8x32xf32>
    %163 = arith.mulf %152, %139 : vector<8x32xf32>
    %164 = arith.addf %162, %163 : vector<8x32xf32>
    %cst_39 = arith.constant dense<0.000000e+00> : vector<8x96xf32>
    %165 = tpu.matmul %164, %13, %cst_39 {dimension_numbers = #tpu.dot_dimension_numbers<[1], [0], [0], [1], [0, 0, 1, 1], [], []>} : vector<8x32xf32>, vector<32x96xf32>, vector<8x96xf32> -> vector<8x96xf32>
    %166 = vector.extract_strided_slice %11 {offsets = [48, 0], sizes = [8, 64], strides = [1, 1]} : vector<64x64xf32> to vector<8x64xf32>
    %167 = vector.extract_strided_slice %165 {offsets = [0, 0], sizes = [8, 64], strides = [1, 1]} : vector<8x96xf32> to vector<8x64xf32>
    %168 = arith.addf %166, %167 : vector<8x64xf32>
    %cst_40 = arith.constant 5.000000e-01 : f32
    %169 = vector.broadcast %cst_40 : f32 to vector<8x64xf32>
    %170 = arith.mulf %169, %168 : vector<8x64xf32>
    %171 = math.tanh %170 : vector<8x64xf32>
    %cst_41 = arith.constant 1.000000e+00 : f32
    %172 = vector.broadcast %cst_41 : f32 to vector<8x64xf32>
    %173 = arith.addf %171, %172 : vector<8x64xf32>
    %cst_42 = arith.constant 5.000000e-01 : f32
    %174 = vector.broadcast %cst_42 : f32 to vector<8x64xf32>
    %175 = arith.mulf %174, %173 : vector<8x64xf32>
    %176 = vector.extract_strided_slice %175 {offsets = [0, 0], sizes = [8, 32], strides = [1, 1]} : vector<8x64xf32> to vector<8x32xf32>
    %177 = vector.extract_strided_slice %175 {offsets = [0, 32], sizes = [8, 32], strides = [1, 1]} : vector<8x64xf32> to vector<8x32xf32>
    %178 = vector.extract_strided_slice %12 {offsets = [48, 0], sizes = [8, 32], strides = [1, 1]} : vector<64x32xf32> to vector<8x32xf32>
    %179 = vector.extract_strided_slice %165 {offsets = [0, 64], sizes = [8, 32], strides = [1, 1]} : vector<8x96xf32> to vector<8x32xf32>
    %180 = vector.broadcast %2 : vector<1x32xf32> to vector<8x32xf32>
    %181 = arith.addf %179, %180 : vector<8x32xf32>
    %182 = arith.mulf %176, %181 : vector<8x32xf32>
    %183 = arith.addf %178, %182 : vector<8x32xf32>
    %184 = math.tanh %183 : vector<8x32xf32>
    %cst_43 = arith.constant 1.000000e+00 : f32
    %185 = vector.broadcast %cst_43 : f32 to vector<8x32xf32>
    %186 = arith.subf %185, %177 : vector<8x32xf32>
    %187 = arith.mulf %186, %184 : vector<8x32xf32>
    %188 = arith.mulf %177, %164 : vector<8x32xf32>
    %189 = arith.addf %187, %188 : vector<8x32xf32>
    %cst_44 = arith.constant dense<0.000000e+00> : vector<8x96xf32>
    %190 = tpu.matmul %189, %13, %cst_44 {dimension_numbers = #tpu.dot_dimension_numbers<[1], [0], [0], [1], [0, 0, 1, 1], [], []>} : vector<8x32xf32>, vector<32x96xf32>, vector<8x96xf32> -> vector<8x96xf32>
    %191 = vector.extract_strided_slice %11 {offsets = [56, 0], sizes = [8, 64], strides = [1, 1]} : vector<64x64xf32> to vector<8x64xf32>
    %192 = vector.extract_strided_slice %190 {offsets = [0, 0], sizes = [8, 64], strides = [1, 1]} : vector<8x96xf32> to vector<8x64xf32>
    %193 = arith.addf %191, %192 : vector<8x64xf32>
    %cst_45 = arith.constant 5.000000e-01 : f32
    %194 = vector.broadcast %cst_45 : f32 to vector<8x64xf32>
    %195 = arith.mulf %194, %193 : vector<8x64xf32>
    %196 = math.tanh %195 : vector<8x64xf32>
    %cst_46 = arith.constant 1.000000e+00 : f32
    %197 = vector.broadcast %cst_46 : f32 to vector<8x64xf32>
    %198 = arith.addf %196, %197 : vector<8x64xf32>
    %cst_47 = arith.constant 5.000000e-01 : f32
    %199 = vector.broadcast %cst_47 : f32 to vector<8x64xf32>
    %200 = arith.mulf %199, %198 : vector<8x64xf32>
    %201 = vector.extract_strided_slice %200 {offsets = [0, 0], sizes = [8, 32], strides = [1, 1]} : vector<8x64xf32> to vector<8x32xf32>
    %202 = vector.extract_strided_slice %200 {offsets = [0, 32], sizes = [8, 32], strides = [1, 1]} : vector<8x64xf32> to vector<8x32xf32>
    %203 = vector.extract_strided_slice %12 {offsets = [56, 0], sizes = [8, 32], strides = [1, 1]} : vector<64x32xf32> to vector<8x32xf32>
    %204 = vector.extract_strided_slice %190 {offsets = [0, 64], sizes = [8, 32], strides = [1, 1]} : vector<8x96xf32> to vector<8x32xf32>
    %205 = vector.broadcast %2 : vector<1x32xf32> to vector<8x32xf32>
    %206 = arith.addf %204, %205 : vector<8x32xf32>
    %207 = arith.mulf %201, %206 : vector<8x32xf32>
    %208 = arith.addf %203, %207 : vector<8x32xf32>
    %209 = math.tanh %208 : vector<8x32xf32>
    %cst_48 = arith.constant 1.000000e+00 : f32
    %210 = vector.broadcast %cst_48 : f32 to vector<8x32xf32>
    %211 = arith.subf %210, %202 : vector<8x32xf32>
    %212 = arith.mulf %211, %209 : vector<8x32xf32>
    %213 = arith.mulf %202, %189 : vector<8x32xf32>
    %214 = arith.addf %212, %213 : vector<8x32xf32>
    %c0_49 = arith.constant 0 : index
    %c0_50 = arith.constant 0 : index
    %215 = vector.load %arg9[%c0_49, %c0_50] : memref<8x32xf32, #tpu.memory_space<vmem>>, vector<8x32xf32>
    tpu.vector_store %arg9[%c0_49, %c0_50], %214 {strides = array<i32>} : memref<8x32xf32, #tpu.memory_space<vmem>>, vector<8x32xf32>,
    %216 = tpu.concatenate %39, %64, %89, %114, %139, %164, %189, %214 in 0 : vector<8x32xf32>, vector<8x32xf32>, vector<8x32xf32>, vector<8x32xf32>, vector<8x32xf32>, vector<8x32xf32>, vector<8x32xf32>, vector<8x32xf32> -> vector<64x32xf32>
    %c0_51 = arith.constant 0 : index
    %c0_52 = arith.constant 0 : index
    %217 = vector.load %arg4[%c0_51, %c0_52] : memref<32x32xf32, #tpu.memory_space<vmem>>, vector<32x32xf32>
    %cst_53 = arith.constant dense<0.000000e+00> : vector<64x32xf32>
    %218 = tpu.matmul %216, %217, %cst_53 {dimension_numbers = #tpu.dot_dimension_numbers<[1], [0], [0], [1], [0, 0, 1, 1], [], []>} : vector<64x32xf32>, vector<32x32xf32>, vector<64x32xf32> -> vector<64x32xf32>
    %219 = vector.broadcast %3 : vector<1x32xf32> to vector<64x32xf32>
    %220 = arith.addf %218, %219 : vector<64x32xf32>
    %221 = math.tanh %220 : vector<64x32xf32>
    %c0_54 = arith.constant 0 : index
    %c0_55 = arith.constant 0 : index
    %222 = vector.load %arg5[%c0_54, %c0_55] : memref<32x64xf32, #tpu.memory_space<vmem>>, vector<32x64xf32>
    %cst_56 = arith.constant dense<0.000000e+00> : vector<64x64xf32>
    %223 = tpu.matmul %221, %222, %cst_56 {dimension_numbers = #tpu.dot_dimension_numbers<[1], [0], [0], [1], [0, 0, 1, 1], [], []>} : vector<64x32xf32>, vector<32x64xf32>, vector<64x64xf32> -> vector<64x64xf32>
    %224 = vector.broadcast %4 : vector<1x64xf32> to vector<64x64xf32>
    %225 = arith.addf %223, %224 : vector<64x64xf32>
    %226 = math.tanh %225 : vector<64x64xf32>
    %c0_57 = arith.constant 0 : index
    %c0_58 = arith.constant 0 : index
    %227 = vector.load %arg6[%c0_57, %c0_58] : memref<64x128xf32, #tpu.memory_space<vmem>>, vector<64x128xf32>
    %cst_59 = arith.constant dense<0.000000e+00> : vector<64x128xf32>
    %228 = tpu.matmul %226, %227, %cst_59 {dimension_numbers = #tpu.dot_dimension_numbers<[1], [0], [0], [1], [0, 0, 1, 1], [], []>} : vector<64x64xf32>, vector<64x128xf32>, vector<64x128xf32> -> vector<64x128xf32>
    %229 = vector.broadcast %5 : vector<1x128xf32> to vector<64x128xf32>
    %230 = arith.addf %228, %229 : vector<64x128xf32>
    %231 = tpu.iota {dimensions = array<i32: 1>} : vector<64x128xi32>
    %c4_i32 = arith.constant 4 : i32
    %232 = vector.broadcast %c4_i32 : i32 to vector<64x128xi32>
    %233 = arith.cmpi slt, %231, %232 : vector<64x128xi32>
    %234 = math.tanh %230 : vector<64x128xf32>
    %235 = arith.select %233, %234, %230 : vector<64x128xi1>, vector<64x128xf32>
    %c0_60 = arith.constant 0 : index
    %c0_61 = arith.constant 0 : index
    %236 = vector.load %arg8[%c0_60, %c0_61] : memref<64x128xf32, #tpu.memory_space<vmem>>, vector<64x128xf32>
    tpu.vector_store %arg8[%c0_60, %c0_61], %235 {strides = array<i32>} : memref<64x128xf32, #tpu.memory_space<vmem>>, vector<64x128xf32>,
    return
  }
}

</mosaic_0001>

<llo_original>
// kernel: actor_critic_forward.1
$region0: #{actor_critic_forward.1}
  #allocation0 [shape = 'u32[]', space=smem, size = 0x4, offset = 0x4, fixed_abs, tag = 'smem constant byte address 0x4 - core index']
  #allocation1 [shape = 'u32[144,128]{1,0:T(1,128)}', space=vmem, size = 0x12000, scoped, tag = 'internal scratch']
  %s0 = inlined_call_operand.vmem [shape: f32[64,16], index: 0, kind: input, shape index: {}]
  %s1 = inlined_call_operand.vmem [shape: f32[8,32], index: 1, kind: input, shape index: {}]
  %s2 = inlined_call_operand.vmem [shape: f32[16,96], index: 2, kind: input, shape index: {}]
  %s3 = inlined_call_operand.vmem [shape: f32[32,96], index: 3, kind: input, shape index: {}]
  %s4 = inlined_call_operand.vmem [shape: f32[32,32], index: 4, kind: input, shape index: {}]
  %s5 = inlined_call_operand.vmem [shape: f32[32,64], index: 5, kind: input, shape index: {}]
  %s6 = inlined_call_operand.vmem [shape: f32[64,128], index: 6, kind: input, shape index: {}]
  %s7 = inlined_call_operand.vmem [shape: f32[8,128], index: 7, kind: input, shape index: {}]
  %s8 = inlined_call_operand.vmem [shape: f32[64,128], index: 8, kind: output, shape index: {0}]
  %s9 = inlined_call_operand.vmem [shape: f32[8,32], index: 9, kind: output, shape index: {1}]
  %10 = xla_tuple %s8, %s9
  %s11 = sld [smem:[#allocation0]]
  $region50: #{actor_critic_forward.1} parent=0
    _
  %s13 = ssub.s32 1, %s11
  %s14 = scalar_select 0, %s13, %s11
  // Predicated region
  $region2: #{actor_critic_forward.1} parent=0 // pred_check
    _
  $region3: #{actor_critic_forward.1} parent=0 // pred_check_branch
    %16 = sbr.rel (0) target = $region5
  $region4: #{actor_critic_forward.1} parent=0 // pred_region
    _
  $region5: #{actor_critic_forward.1} parent=0 // pred_fallthru
    _
  // Predicated region
  $region6: #{actor_critic_forward.1} parent=0 // pred_check
    _
  $region7: #{actor_critic_forward.1} parent=0 // pred_check_branch
    %18 = sbr.rel (0) target = $region9
  $region8: #{actor_critic_forward.1} parent=0 // pred_region
    _
  $region9: #{actor_critic_forward.1} parent=0 // pred_fallthru
    _
  // Predicated region
  $region10: #{actor_critic_forward.1} parent=0 // pred_check
    _
  $region11: #{actor_critic_forward.1} parent=0 // pred_check_branch
    %20 = sbr.rel (0) target = $region13
  $region12: #{actor_critic_forward.1} parent=0 // pred_region
    _
  $region13: #{actor_critic_forward.1} parent=0 // pred_fallthru
    _
  // Predicated region
  $region14: #{actor_critic_forward.1} parent=0 // pred_check
    _
  $region15: #{actor_critic_forward.1} parent=0 // pred_check_branch
    %22 = sbr.rel (0) target = $region17
  $region16: #{actor_critic_forward.1} parent=0 // pred_region
    _
  $region17: #{actor_critic_forward.1} parent=0 // pred_fallthru
    _
  // Predicated region
  $region18: #{actor_critic_forward.1} parent=0 // pred_check
    _
  $region19: #{actor_critic_forward.1} parent=0 // pred_check_branch
    %24 = sbr.rel (0) target = $region21
  $region20: #{actor_critic_forward.1} parent=0 // pred_region
    _
  $region21: #{actor_critic_forward.1} parent=0 // pred_fallthru
    _
  // Predicated region
  $region22: #{actor_critic_forward.1} parent=0 // pred_check
    _
  $region23: #{actor_critic_forward.1} parent=0 // pred_check_branch
    %26 = sbr.rel (0) target = $region25
  $region24: #{actor_critic_forward.1} parent=0 // pred_region
    _
  $region25: #{actor_critic_forward.1} parent=0 // pred_fallthru
    _
  // Predicated region
  $region26: #{actor_critic_forward.1} parent=0 // pred_check
    _
  $region27: #{actor_critic_forward.1} parent=0 // pred_check_branch
    %28 = sbr.rel (0) target = $region29
  $region28: #{actor_critic_forward.1} parent=0 // pred_region
    _
  $region29: #{actor_critic_forward.1} parent=0 // pred_fallthru
    _
  // Predicated region
  $region30: #{actor_critic_forward.1} parent=0 // pred_check
    _
  $region31: #{actor_critic_forward.1} parent=0 // pred_check_branch
    %30 = sbr.rel (0) target = $region33
  $region32: #{actor_critic_forward.1} parent=0 // pred_region
    _
  $region33: #{actor_critic_forward.1} parent=0 // pred_fallthru
    _
  %v31 = vld [vmem:[%s7] sm:$0xff]
  %v32 = vld [vmem:[%s0] sm:$0xff]
  %v33 = vld [vmem:[%s0 + $0x8] sm:$0xff]
  %v34 = vld [vmem:[%s0 + $0x10] sm:$0xff]
  %v35 = vld [vmem:[%s0 + $0x18] sm:$0xff]
  %v36 = vld [vmem:[%s0 + $0x20] sm:$0xff]
  %v37 = vld [vmem:[%s0 + $0x28] sm:$0xff]
  %v38 = vld [vmem:[%s0 + $0x30] sm:$0xff]
  %v39 = vld [vmem:[%s0 + $0x38] sm:$0xff]
  %v40 = vld [vmem:[%s2] sm:$0xff]
  %v41 = vld [vmem:[%s2 + $0x8] sm:$0xff]
  %v42 = vlaneseq
  %v43 = vshrl.u32 %v42, 7
  %v44 = vsub.s32 0, %v43
  %v45 = vrot.slane %v31, %v44
  %vm46 = vcmask 130048
  %v48 = vsel %vm46, %v32, 0
  %v51 = vsel %vm46, %v33, 0
  %v54 = vsel %vm46, %v34, 0
  %v57 = vsel %vm46, %v35, 0
  %v60 = vsel %vm46, %v36, 0
  %v63 = vsel %vm46, %v37, 0
  %v66 = vsel %vm46, %v38, 0
  %v69 = vsel %vm46, %v39, 0
  %71 = vmatprep.subr.mxu0 0.0
  %72 = vmatpush1.msra.mxu0 0.0
  %73 = vmatprep.subr.mxu0 0.0
  %74 = vmatpush1.msra.mxu0 0.0
  %75 = vmatprep.subr.mxu0 0.0
  %76 = vmatpush1.msra.mxu0 0.0
  %77 = vmatprep.subr.mxu0 0.0
  %78 = vmatpush1.msra.mxu0 0.0
  %79 = vmatprep.subr.mxu0 0.0
  %80 = vmatpush1.msra.mxu0 0.0
  %81 = vmatprep.subr.mxu0 0.0
  %82 = vmatpush1.msra.mxu0 0.0
  %83 = vmatprep.subr.mxu0 0.0
  %84 = vmatpush1.msra.mxu0 0.0
  %85 = vmatprep.subr.mxu0 0.0
  %86 = vmatpush1.msra.mxu0 0.0
  %87 = vmatprep.subr.mxu0 0.0
  %88 = vmatpush1.msra.mxu0 0.0
  %89 = vmatprep.subr.mxu0 0.0
  %90 = vmatpush1.msra.mxu0 0.0
  %91 = vmatprep.subr.mxu0 0.0
  %92 = vmatpush1.msra.mxu0 0.0
  %93 = vmatprep.subr.mxu0 0.0
  %94 = vmatpush1.msra.mxu0 0.0
  %95 = vmatprep.subr.mxu0 0.0
  %96 = vmatpush1.msra.mxu0 0.0
  %97 = vmatprep.subr.mxu0 0.0
  %98 = vmatpush1.msra.mxu0 0.0
  %99 = vmatprep.subr.mxu0 0.0
  %100 = vmatpush1.msra.mxu0 %v41
  %101 = vmatprep.subr.mxu0 0.0
  %102 = vmatpush1.msra.mxu0 %v40
  %103 = vmatprep.subr.mxu0 0.0
  %104 = vmatpush2.msra.mxu0 0.0
  %105 = vmatprep.subr.mxu0 0.0
  %106 = vmatpush2.msra.mxu0 0.0
  %107 = vmatprep.subr.mxu0 0.0
  %108 = vmatpush2.msra.mxu0 0.0
  %109 = vmatprep.subr.mxu0 0.0
  %110 = vmatpush2.msra.mxu0 0.0
  %111 = vmatprep.subr.mxu0 0.0
  %112 = vmatpush2.msra.mxu0 0.0
  %113 = vmatprep.subr.mxu0 0.0
  %114 = vmatpush2.msra.mxu0 0.0
  %115 = vmatprep.subr.mxu0 0.0
  %116 = vmatpush2.msra.mxu0 0.0
  %117 = vmatprep.subr.mxu0 0.0
  %118 = vmatpush2.msra.mxu0 0.0
  %119 = vmatprep.subr.mxu0 0.0
  %120 = vmatpush2.msra.mxu0 0.0
  %121 = vmatprep.subr.mxu0 0.0
  %122 = vmatpush2.msra.mxu0 0.0
  %123 = vmatprep.subr.mxu0 0.0
  %124 = vmatpush2.msra.mxu0 0.0
  %125 = vmatprep.subr.mxu0 0.0
  %126 = vmatpush2.msra.mxu0 0.0
  %127 = vmatprep.subr.mxu0 0.0
  %128 = vmatpush2.msra.mxu0 0.0
  %129 = vmatprep.subr.mxu0 0.0
  %130 = vmatpush2.msra.mxu0 0.0
  %131 = vmatprep.subr.mxu0 0.0
  %132 = vmatpush2.msra.mxu0 0.0
  %133 = vmatprep.subr.mxu0 0.0
  %134 = vmatpush2.msra.mxu0 0.0
  %135 = vmatprep.mubr.f32.mxu0 0.0
  %136 = vmatmul.mubr.f32.gmra.mxu0 %v48
  %v137 = vpop.f32.mrf.mxu0
  %v138 = vadd.f32 %v45, %v137
  %v139 = vpop.f32.mrf.mxu0
  %140 = vmatprep.mubr.f32.mxu0 0.0
  %141 = vmatmul.mubr.f32.gmra.mxu0 %v51
  %v142 = vpop.f32.mrf.mxu0
  %v143 = vadd.f32 %v45, %v142
  %v144 = vpop.f32.mrf.mxu0
  %145 = vmatprep.mubr.f32.mxu0 0.0
  %146 = vmatmul.mubr.f32.gmra.mxu0 %v54
  %v147 = vpop.f32.mrf.mxu0
  %v148 = vadd.f32 %v45, %v147
  %v149 = vpop.f32.mrf.mxu0
  %150 = vmatprep.mubr.f32.mxu0 0.0
  %151 = vmatmul.mubr.f32.gmra.mxu0 %v57
  %v152 = vpop.f32.mrf.mxu0
  %v153 = vadd.f32 %v45, %v152
  %v154 = vpop.f32.mrf.mxu0
  %155 = vmatprep.mubr.f32.mxu0 0.0
  %156 = vmatmul.mubr.f32.gmra.mxu0 %v60
  %v157 = vpop.f32.mrf.mxu0
  %v158 = vadd.f32 %v45, %v157
  %v159 = vpop.f32.mrf.mxu0
  %160 = vmatprep.mubr.f32.mxu0 0.0
  %161 = vmatmul.mubr.f32.gmra.mxu0 %v63
  %v162 = vpop.f32.mrf.mxu0
  %v163 = vadd.f32 %v45, %v162
  %v164 = vpop.f32.mrf.mxu0
  %165 = vmatprep.mubr.f32.mxu0 0.0
  %166 = vmatmul.mubr.f32.gmra.mxu0 %v66
  %v167 = vpop.f32.mrf.mxu0
  %v168 = vadd.f32 %v45, %v167
  %v169 = vpop.f32.mrf.mxu0
  %170 = vmatprep.mubr.f32.mxu0 0.0
  %171 = vmatmul.mubr.f32.gmra.mxu0 %v69
  %v172 = vpop.f32.mrf.mxu0
  %v173 = vadd.f32 %v45, %v172
  %v174 = vpop.f32.mrf.mxu0
  %175 = vdwg.mxu0
  %v176 = vld [vmem:[%s3] sm:$0xff]
  %v177 = vld [vmem:[%s3 + $0x8] sm:$0xff]
  %v178 = vld [vmem:[%s3 + $0x10] sm:$0xff]
  %v179 = vld [vmem:[%s3 + $0x18] sm:$0xff]
  %v180 = vld [vmem:[%s1] sm:$0xff]
  %vm181 = vcmask 261120
  %v183 = vsel %vm181, %v180, 0
  %185 = vmatprep.subr.mxu0 0.0
  %186 = vmatpush1.msra.mxu0 0.0
  %187 = vmatprep.subr.mxu0 0.0
  %188 = vmatpush1.msra.mxu0 0.0
  %189 = vmatprep.subr.mxu0 0.0
  %190 = vmatpush1.msra.mxu0 0.0
  %191 = vmatprep.subr.mxu0 0.0
  %192 = vmatpush1.msra.mxu0 0.0
  %193 = vmatprep.subr.mxu0 0.0
  %194 = vmatpush1.msra.mxu0 0.0
  %195 = vmatprep.subr.mxu0 0.0
  %196 = vmatpush1.msra.mxu0 0.0
  %197 = vmatprep.subr.mxu0 0.0
  %198 = vmatpush1.msra.mxu0 0.0
  %199 = vmatprep.subr.mxu0 0.0
  %200 = vmatpush1.msra.mxu0 0.0
  %201 = vmatprep.subr.mxu0 0.0
  %202 = vmatpush1.msra.mxu0 0.0
  %203 = vmatprep.subr.mxu0 0.0
  %204 = vmatpush1.msra.mxu0 0.0
  %205 = vmatprep.subr.mxu0 0.0
  %206 = vmatpush1.msra.mxu0 0.0
  %207 = vmatprep.subr.mxu0 0.0
  %208 = vmatpush1.msra.mxu0 0.0
  %209 = vmatprep.subr.mxu0 0.0
  %210 = vmatpush1.msra.mxu0 %v179
  %211 = vmatprep.subr.mxu0 0.0
  %212 = vmatpush1.msra.mxu0 %v178
  %213 = vmatprep.subr.mxu0 0.0
  %214 = vmatpush1.msra.mxu0 %v177
  %215 = vmatprep.subr.mxu0 0.0
  %216 = vmatpush1.msra.mxu0 %v176
  %217 = vmatprep.subr.mxu0 0.0
  %218 = vmatpush2.msra.mxu0 0.0
  %219 = vmatprep.subr.mxu0 0.0
  %220 = vmatpush2.msra.mxu0 0.0
  %221 = vmatprep.subr.mxu0 0.0
  %222 = vmatpush2.msra.mxu0 0.0
  %223 = vmatprep.subr.mxu0 0.0
  %224 = vmatpush2.msra.mxu0 0.0
  %225 = vmatprep.subr.mxu0 0.0
  %226 = vmatpush2.msra.mxu0 0.0
  %227 = vmatprep.subr.mxu0 0.0
  %228 = vmatpush2.msra.mxu0 0.0
  %229 = vmatprep.subr.mxu0 0.0
  %230 = vmatpush2.msra.mxu0 0.0
  %231 = vmatprep.subr.mxu0 0.0
  %232 = vmatpush2.msra.mxu0 0.0
  %233 = vmatprep.subr.mxu0 0.0
  %234 = vmatpush2.msra.mxu0 0.0
  %235 = vmatprep.subr.mxu0 0.0
  %236 = vmatpush2.msra.mxu0 0.0
  %237 = vmatprep.subr.mxu0 0.0
  %238 = vmatpush2.msra.mxu0 0.0
  %239 = vmatprep.subr.mxu0 0.0
  %240 = vmatpush2.msra.mxu0 0.0
  %241 = vmatprep.subr.mxu0 0.0
  %242 = vmatpush2.msra.mxu0 0.0
  %243 = vmatprep.subr.mxu0 0.0
  %244 = vmatpush2.msra.mxu0 0.0
  %245 = vmatprep.subr.mxu0 0.0
  %246 = vmatpush2.msra.mxu0 0.0
  %247 = vmatprep.subr.mxu0 0.0
  %248 = vmatpush2.msra.mxu0 0.0
  %249 = vmatprep.mubr.f32.mxu0 0.0
  %250 = vmatmul.mubr.f32.gmra.mxu0 %v183
  %v251 = vpop.f32.mrf.mxu0
  %v252 = vadd.f32 0.0, %v251
  %v253 = vpop.f32.mrf.mxu0
  %254 = vdwg.mxu0
  %v255 = vadd.f32 %v138, %v252
  %v256 = vmul.f32 %v255, 0.5
  %v257 = vtanh.pop %v256
  %v258 = vadd.f32 %v257, 1.0
  %v259 = vmul.f32 %v258, 0.5
  %v260 = vlaneseq
  %v261 = vshrl.u32 %v260, 7
  %v262 = vsub.s32 1, %v261
  %v263 = vrot.slane %v31, %v262
  %265 = vrot.lane.b32.xlu0 %v263, 64
  %v266 = vpop.permute.xlu0 %265
  %v268 = vadd.f32 %v252, %v266
  %270 = vrot.lane.b32.xlu0 %v268, 64
  %v271 = vpop.permute.xlu0 %270
  %v273 = vmul.f32 %v259, %v271
  %275 = vrot.lane.b32.xlu0 %v273, 64
  %v276 = vpop.permute.xlu0 %275
  %v278 = vadd.f32 %v138, %v276
  %v279 = vtanh.pop %v278
  %v280 = vsub.f32 1.0, %v259
  %282 = vrot.lane.b32.xlu0 %v279, 96
  %v283 = vpop.permute.xlu0 %282
  %v285 = vmul.f32 %v280, %v283
  %286 = vrot.lane.b32.xlu0 %v180, 32
  %v287 = vpop.permute.xlu0 %286
  %v289 = vmul.f32 %v259, %v287
  %v290 = vadd.f32 %v285, %v289
  %292 = vrot.lane.b32.xlu0 %v290, 96
  %v293 = vpop.permute.xlu0 %292
  %v294 = vsel %vm181, %v293, 0
  %296 = vmatprep.subr.mxu0 0.0
  %297 = vmatpush1.msra.mxu0 0.0
  %298 = vmatprep.subr.mxu0 0.0
  %299 = vmatpush1.msra.mxu0 0.0
  %300 = vmatprep.subr.mxu0 0.0
  %301 = vmatpush1.msra.mxu0 0.0
  %302 = vmatprep.subr.mxu0 0.0
  %303 = vmatpush1.msra.mxu0 0.0
  %304 = vmatprep.subr.mxu0 0.0
  %305 = vmatpush1.msra.mxu0 0.0
  %306 = vmatprep.subr.mxu0 0.0
  %307 = vmatpush1.msra.mxu0 0.0
  %308 = vmatprep.subr.mxu0 0.0
  %309 = vmatpush1.msra.mxu0 0.0
  %310 = vmatprep.subr.mxu0 0.0
  %311 = vmatpush1.msra.mxu0 0.0
  %312 = vmatprep.subr.mxu0 0.0
  %313 = vmatpush1.msra.mxu0 0.0
  %314 = vmatprep.subr.mxu0 0.0
  %315 = vmatpush1.msra.mxu0 0.0
  %316 = vmatprep.subr.mxu0 0.0
  %317 = vmatpush1.msra.mxu0 0.0
  %318 = vmatprep.subr.mxu0 0.0
  %319 = vmatpush1.msra.mxu0 0.0
  %320 = vmatprep.subr.mxu0 0.0
  %321 = vmatpush1.msra.mxu0 %v179
  %322 = vmatprep.subr.mxu0 0.0
  %323 = vmatpush1.msra.mxu0 %v178
  %324 = vmatprep.subr.mxu0 0.0
  %325 = vmatpush1.msra.mxu0 %v177
  %326 = vmatprep.subr.mxu0 0.0
  %327 = vmatpush1.msra.mxu0 %v176
  %328 = vmatprep.subr.mxu0 0.0
  %329 = vmatpush2.msra.mxu0 0.0
  %330 = vmatprep.subr.mxu0 0.0
  %331 = vmatpush2.msra.mxu0 0.0
  %332 = vmatprep.subr.mxu0 0.0
  %333 = vmatpush2.msra.mxu0 0.0
  %334 = vmatprep.subr.mxu0 0.0
  %335 = vmatpush2.msra.mxu0 0.0
  %336 = vmatprep.subr.mxu0 0.0
  %337 = vmatpush2.msra.mxu0 0.0
  %338 = vmatprep.subr.mxu0 0.0
  %339 = vmatpush2.msra.mxu0 0.0
  %340 = vmatprep.subr.mxu0 0.0
  %341 = vmatpush2.msra.mxu0 0.0
  %342 = vmatprep.subr.mxu0 0.0
  %343 = vmatpush2.msra.mxu0 0.0
  %344 = vmatprep.subr.mxu0 0.0
  %345 = vmatpush2.msra.mxu0 0.0
  %346 = vmatprep.subr.mxu0 0.0
  %347 = vmatpush2.msra.mxu0 0.0
  %348 = vmatprep.subr.mxu0 0.0
  %349 = vmatpush2.msra.mxu0 0.0
  %350 = vmatprep.subr.mxu0 0.0
  %351 = vmatpush2.msra.mxu0 0.0
  %352 = vmatprep.subr.mxu0 0.0
  %353 = vmatpush2.msra.mxu0 0.0
  %354 = vmatprep.subr.mxu0 0.0
  %355 = vmatpush2.msra.mxu0 0.0
  %356 = vmatprep.subr.mxu0 0.0
  %357 = vmatpush2.msra.mxu0 0.0
  %358 = vmatprep.subr.mxu0 0.0
  %359 = vmatpush2.msra.mxu0 0.0
  %360 = vmatprep.mubr.f32.mxu0 0.0
  %361 = vmatmul.mubr.f32.gmra.mxu0 %v294
  %v362 = vpop.f32.mrf.mxu0
  %v363 = vadd.f32 0.0, %v362
  %v364 = vpop.f32.mrf.mxu0
  %365 = vdwg.mxu0
  %v366 = vadd.f32 %v143, %v363
  %v367 = vmul.f32 %v366, 0.5
  %v368 = vtanh.pop %v367
  %v369 = vadd.f32 %v368, 1.0
  %v370 = vmul.f32 %v369, 0.5
  %v371 = vadd.f32 %v363, %v266
  %373 = vrot.lane.b32.xlu0 %v371, 64
  %v374 = vpop.permute.xlu0 %373
  %v376 = vmul.f32 %v370, %v374
  %378 = vrot.lane.b32.xlu0 %v376, 64
  %v379 = vpop.permute.xlu0 %378
  %v381 = vadd.f32 %v143, %v379
  %v382 = vtanh.pop %v381
  %v383 = vsub.f32 1.0, %v370
  %385 = vrot.lane.b32.xlu0 %v382, 96
  %v386 = vpop.permute.xlu0 %385
  %v388 = vmul.f32 %v383, %v386
  %v389 = vmul.f32 %v370, %v290
  %v390 = vadd.f32 %v388, %v389
  %392 = vrot.lane.b32.xlu0 %v390, 96
  %v393 = vpop.permute.xlu0 %392
  %v394 = vsel %vm181, %v393, 0
  %396 = vmatprep.subr.mxu0 0.0
  %397 = vmatpush1.msra.mxu0 0.0
  %398 = vmatprep.subr.mxu0 0.0
  %399 = vmatpush1.msra.mxu0 0.0
  %400 = vmatprep.subr.mxu0 0.0
  %401 = vmatpush1.msra.mxu0 0.0
  %402 = vmatprep.subr.mxu0 0.0
  %403 = vmatpush1.msra.mxu0 0.0
  %404 = vmatprep.subr.mxu0 0.0
  %405 = vmatpush1.msra.mxu0 0.0
  %406 = vmatprep.subr.mxu0 0.0
  %407 = vmatpush1.msra.mxu0 0.0
  %408 = vmatprep.subr.mxu0 0.0
  %409 = vmatpush1.msra.mxu0 0.0
  %410 = vmatprep.subr.mxu0 0.0
  %411 = vmatpush1.msra.mxu0 0.0
  %412 = vmatprep.subr.mxu0 0.0
  %413 = vmatpush1.msra.mxu0 0.0
  %414 = vmatprep.subr.mxu0 0.0
  %415 = vmatpush1.msra.mxu0 0.0
  %416 = vmatprep.subr.mxu0 0.0
  %417 = vmatpush1.msra.mxu0 0.0
  %418 = vmatprep.subr.mxu0 0.0
  %419 = vmatpush1.msra.mxu0 0.0
  %420 = vmatprep.subr.mxu0 0.0
  %421 = vmatpush1.msra.mxu0 %v179
  %422 = vmatprep.subr.mxu0 0.0
  %423 = vmatpush1.msra.mxu0 %v178
  %424 = vmatprep.subr.mxu0 0.0
  %425 = vmatpush1.msra.mxu0 %v177
  %426 = vmatprep.subr.mxu0 0.0
  %427 = vmatpush1.msra.mxu0 %v176
  %428 = vmatprep.subr.mxu0 0.0
  %429 = vmatpush2.msra.mxu0 0.0
  %430 = vmatprep.subr.mxu0 0.0
  %431 = vmatpush2.msra.mxu0 0.0
  %432 = vmatprep.subr.mxu0 0.0
  %433 = vmatpush2.msra.mxu0 0.0
  %434 = vmatprep.subr.mxu0 0.0
  %435 = vmatpush2.msra.mxu0 0.0
  %436 = vmatprep.subr.mxu0 0.0
  %437 = vmatpush2.msra.mxu0 0.0
  %438 = vmatprep.subr.mxu0 0.0
  %439 = vmatpush2.msra.mxu0 0.0
  %440 = vmatprep.subr.mxu0 0.0
  %441 = vmatpush2.msra.mxu0 0.0
  %442 = vmatprep.subr.mxu0 0.0
  %443 = vmatpush2.msra.mxu0 0.0
  %444 = vmatprep.subr.mxu0 0.0
  %445 = vmatpush2.msra.mxu0 0.0
  %446 = vmatprep.subr.mxu0 0.0
  %447 = vmatpush2.msra.mxu0 0.0
  %448 = vmatprep.subr.mxu0 0.0
  %449 = vmatpush2.msra.mxu0 0.0
  %450 = vmatprep.subr.mxu0 0.0
  %451 = vmatpush2.msra.mxu0 0.0
  %452 = vmatprep.subr.mxu0 0.0
  %453 = vmatpush2.msra.mxu0 0.0
  %454 = vmatprep.subr.mxu0 0.0
  %455 = vmatpush2.msra.mxu0 0.0
  %456 = vmatprep.subr.mxu0 0.0
  %457 = vmatpush2.msra.mxu0 0.0
  %458 = vmatprep.subr.mxu0 0.0
  %459 = vmatpush2.msra.mxu0 0.0
  %460 = vmatprep.mubr.f32.mxu0 0.0
  %461 = vmatmul.mubr.f32.gmra.mxu0 %v394
  %v462 = vpop.f32.mrf.mxu0
  %v463 = vadd.f32 0.0, %v462
  %v464 = vpop.f32.mrf.mxu0
  %465 = vdwg.mxu0
  %v466 = vadd.f32 %v148, %v463
  %v467 = vmul.f32 %v466, 0.5
  %v468 = vtanh.pop %v467
  %v469 = vadd.f32 %v468, 1.0
  %v470 = vmul.f32 %v469, 0.5
  %v471 = vadd.f32 %v463, %v266
  %473 = vrot.lane.b32.xlu0 %v471, 64
  %v474 = vpop.permute.xlu0 %473
  %v476 = vmul.f32 %v470, %v474
  %478 = vrot.lane.b32.xlu0 %v476, 64
  %v479 = vpop.permute.xlu0 %478
  %v481 = vadd.f32 %v148, %v479
  %v482 = vtanh.pop %v481
  %v483 = vsub.f32 1.0, %v470
  %485 = vrot.lane.b32.xlu0 %v482, 96
  %v486 = vpop.permute.xlu0 %485
  %v488 = vmul.f32 %v483, %v486
  %v489 = vmul.f32 %v470, %v390
  %v490 = vadd.f32 %v488, %v489
  %492 = vrot.lane.b32.xlu0 %v490, 96
  %v493 = vpop.permute.xlu0 %492
  %v494 = vsel %vm181, %v493, 0
  %496 = vmatprep.subr.mxu0 0.0
  %497 = vmatpush1.msra.mxu0 0.0
  %498 = vmatprep.subr.mxu0 0.0
  %499 = vmatpush1.msra.mxu0 0.0
  %500 = vmatprep.subr.mxu0 0.0
  %501 = vmatpush1.msra.mxu0 0.0
  %502 = vmatprep.subr.mxu0 0.0
  %503 = vmatpush1.msra.mxu0 0.0
  %504 = vmatprep.subr.mxu0 0.0
  %505 = vmatpush1.msra.mxu0 0.0
  %506 = vmatprep.subr.mxu0 0.0
  %507 = vmatpush1.msra.mxu0 0.0
  %508 = vmatprep.subr.mxu0 0.0
  %509 = vmatpush1.msra.mxu0 0.0
  %510 = vmatprep.subr.mxu0 0.0
  %511 = vmatpush1.msra.mxu0 0.0
  %512 = vmatprep.subr.mxu0 0.0
  %513 = vmatpush1.msra.mxu0 0.0
  %514 = vmatprep.subr.mxu0 0.0
  %515 = vmatpush1.msra.mxu0 0.0
  %516 = vmatprep.subr.mxu0 0.0
  %517 = vmatpush1.msra.mxu0 0.0
  %518 = vmatprep.subr.mxu0 0.0
  %519 = vmatpush1.msra.mxu0 0.0
  %520 = vmatprep.subr.mxu0 0.0
  %521 = vmatpush1.msra.mxu0 %v179
  %522 = vmatprep.subr.mxu0 0.0
  %523 = vmatpush1.msra.mxu0 %v178
  %524 = vmatprep.subr.mxu0 0.0
  %525 = vmatpush1.msra.mxu0 %v177
  %526 = vmatprep.subr.mxu0 0.0
  %527 = vmatpush1.msra.mxu0 %v176
  %528 = vmatprep.subr.mxu0 0.0
  %529 = vmatpush2.msra.mxu0 0.0
  %530 = vmatprep.subr.mxu0 0.0
  %531 = vmatpush2.msra.mxu0 0.0
  %532 = vmatprep.subr.mxu0 0.0
  %533 = vmatpush2.msra.mxu0 0.0
  %534 = vmatprep.subr.mxu0 0.0
  %535 = vmatpush2.msra.mxu0 0.0
  %536 = vmatprep.subr.mxu0 0.0
  %537 = vmatpush2.msra.mxu0 0.0
  %538 = vmatprep.subr.mxu0 0.0
  %539 = vmatpush2.msra.mxu0 0.0
  %540 = vmatprep.subr.mxu0 0.0
  %541 = vmatpush2.msra.mxu0 0.0
  %542 = vmatprep.subr.mxu0 0.0
  %543 = vmatpush2.msra.mxu0 0.0
  %544 = vmatprep.subr.mxu0 0.0
  %545 = vmatpush2.msra.mxu0 0.0
  %546 = vmatprep.subr.mxu0 0.0
  %547 = vmatpush2.msra.mxu0 0.0
  %548 = vmatprep.subr.mxu0 0.0
  %549 = vmatpush2.msra.mxu0 0.0
  %550 = vmatprep.subr.mxu0 0.0
  %551 = vmatpush2.msra.mxu0 0.0
  %552 = vmatprep.subr.mxu0 0.0
  %553 = vmatpush2.msra.mxu0 0.0
  %554 = vmatprep.subr.mxu0 0.0
  %555 = vmatpush2.msra.mxu0 0.0
  %556 = vmatprep.subr.mxu0 0.0
  %557 = vmatpush2.msra.mxu0 0.0
  %558 = vmatprep.subr.mxu0 0.0
  %559 = vmatpush2.msra.mxu0 0.0
  %560 = vmatprep.mubr.f32.mxu0 0.0
  %561 = vmatmul.mubr.f32.gmra.mxu0 %v494
  %v562 = vpop.f32.mrf.mxu0
  %v563 = vadd.f32 0.0, %v562
  %v564 = vpop.f32.mrf.mxu0
  %565 = vdwg.mxu0
  %v566 = vadd.f32 %v153, %v563
  %v567 = vmul.f32 %v566, 0.5
  %v568 = vtanh.pop %v567
  %v569 = vadd.f32 %v568, 1.0
  %v570 = vmul.f32 %v569, 0.5
  %v571 = vadd.f32 %v563, %v266
  %573 = vrot.lane.b32.xlu0 %v571, 64
  %v574 = vpop.permute.xlu0 %573
  %v576 = vmul.f32 %v570, %v574
  %578 = vrot.lane.b32.xlu0 %v576, 64
  %v579 = vpop.permute.xlu0 %578
  %v581 = vadd.f32 %v153, %v579
  %v582 = vtanh.pop %v581
  %v583 = vsub.f32 1.0, %v570
  %585 = vrot.lane.b32.xlu0 %v582, 96
  %v586 = vpop.permute.xlu0 %585
  %v588 = vmul.f32 %v583, %v586
  %v589 = vmul.f32 %v570, %v490
  %v590 = vadd.f32 %v588, %v589
  %592 = vrot.lane.b32.xlu0 %v590, 96
  %v593 = vpop.permute.xlu0 %592
  %v594 = vsel %vm181, %v593, 0
  %596 = vmatprep.subr.mxu0 0.0
  %597 = vmatpush1.msra.mxu0 0.0
  %598 = vmatprep.subr.mxu0 0.0
  %599 = vmatpush1.msra.mxu0 0.0
  %600 = vmatprep.subr.mxu0 0.0
  %601 = vmatpush1.msra.mxu0 0.0
  %602 = vmatprep.subr.mxu0 0.0
  %603 = vmatpush1.msra.mxu0 0.0
  %604 = vmatprep.subr.mxu0 0.0
  %605 = vmatpush1.msra.mxu0 0.0
  %606 = vmatprep.subr.mxu0 0.0
  %607 = vmatpush1.msra.mxu0 0.0
  %608 = vmatprep.subr.mxu0 0.0
  %609 = vmatpush1.msra.mxu0 0.0
  %610 = vmatprep.subr.mxu0 0.0
  %611 = vmatpush1.msra.mxu0 0.0
  %612 = vmatprep.subr.mxu0 0.0
  %613 = vmatpush1.msra.mxu0 0.0
  %614 = vmatprep.subr.mxu0 0.0
  %615 = vmatpush1.msra.mxu0 0.0
  %616 = vmatprep.subr.mxu0 0.0
  %617 = vmatpush1.msra.mxu0 0.0
  %618 = vmatprep.subr.mxu0 0.0
  %619 = vmatpush1.msra.mxu0 0.0
  %620 = vmatprep.subr.mxu0 0.0
  %621 = vmatpush1.msra.mxu0 %v179
  %622 = vmatprep.subr.mxu0 0.0
  %623 = vmatpush1.msra.mxu0 %v178
  %624 = vmatprep.subr.mxu0 0.0
  %625 = vmatpush1.msra.mxu0 %v177
  %626 = vmatprep.subr.mxu0 0.0
  %627 = vmatpush1.msra.mxu0 %v176
  %628 = vmatprep.subr.mxu0 0.0
  %629 = vmatpush2.msra.mxu0 0.0
  %630 = vmatprep.subr.mxu0 0.0
  %631 = vmatpush2.msra.mxu0 0.0
  %632 = vmatprep.subr.mxu0 0.0
  %633 = vmatpush2.msra.mxu0 0.0
  %634 = vmatprep.subr.mxu0 0.0
  %635 = vmatpush2.msra.mxu0 0.0
  %636 = vmatprep.subr.mxu0 0.0
  %637 = vmatpush2.msra.mxu0 0.0
  %638 = vmatprep.subr.mxu0 0.0
  %639 = vmatpush2.msra.mxu0 0.0
  %640 = vmatprep.subr.mxu0 0.0
  %641 = vmatpush2.msra.mxu0 0.0
  %642 = vmatprep.subr.mxu0 0.0
  %643 = vmatpush2.msra.mxu0 0.0
  %644 = vmatprep.subr.mxu0 0.0
  %645 = vmatpush2.msra.mxu0 0.0
  %646 = vmatprep.subr.mxu0 0.0
  %647 = vmatpush2.msra.mxu0 0.0
  %648 = vmatprep.subr.mxu0 0.0
  %649 = vmatpush2.msra.mxu0 0.0
  %650 = vmatprep.subr.mxu0 0.0
  %651 = vmatpush2.msra.mxu0 0.0
  %652 = vmatprep.subr.mxu0 0.0
  %653 = vmatpush2.msra.mxu0 0.0
  %654 = vmatprep.subr.mxu0 0.0
  %655 = vmatpush2.msra.mxu0 0.0
  %656 = vmatprep.subr.mxu0 0.0
  %657 = vmatpush2.msra.mxu0 0.0
  %658 = vmatprep.subr.mxu0 0.0
  %659 = vmatpush2.msra.mxu0 0.0
  %660 = vmatprep.mubr.f32.mxu0 0.0
  %661 = vmatmul.mubr.f32.gmra.mxu0 %v594
  %v662 = vpop.f32.mrf.mxu0
  %v663 = vadd.f32 0.0, %v662
  %v664 = vpop.f32.mrf.mxu0
  %665 = vdwg.mxu0
  %v666 = vadd.f32 %v158, %v663
  %v667 = vmul.f32 %v666, 0.5
  %v668 = vtanh.pop %v667
  %v669 = vadd.f32 %v668, 1.0
  %v670 = vmul.f32 %v669, 0.5
  %v671 = vadd.f32 %v663, %v266
  %673 = vrot.lane.b32.xlu0 %v671, 64
  %v674 = vpop.permute.xlu0 %673
  %v676 = vmul.f32 %v670, %v674
  %678 = vrot.lane.b32.xlu0 %v676, 64
  %v679 = vpop.permute.xlu0 %678
  %v681 = vadd.f32 %v158, %v679
  %v682 = vtanh.pop %v681
  %v683 = vsub.f32 1.0, %v670
  %685 = vrot.lane.b32.xlu0 %v682, 96
  %v686 = vpop.permute.xlu0 %685
  %v688 = vmul.f32 %v683, %v686
  %v689 = vmul.f32 %v670, %v590
  %v690 = vadd.f32 %v688, %v689
  %692 = vrot.lane.b32.xlu0 %v690, 96
  %v693 = vpop.permute.xlu0 %692
  %v694 = vsel %vm181, %v693, 0
  %696 = vmatprep.subr.mxu0 0.0
  %697 = vmatpush1.msra.mxu0 0.0
  %698 = vmatprep.subr.mxu0 0.0
  %699 = vmatpush1.msra.mxu0 0.0
  %700 = vmatprep.subr.mxu0 0.0
  %701 = vmatpush1.msra.mxu0 0.0
  %702 = vmatprep.subr.mxu0 0.0
  %703 = vmatpush1.msra.mxu0 0.0
  %704 = vmatprep.subr.mxu0 0.0
  %705 = vmatpush1.msra.mxu0 0.0
  %706 = vmatprep.subr.mxu0 0.0
  %707 = vmatpush1.msra.mxu0 0.0
  %708 = vmatprep.subr.mxu0 0.0
  %709 = vmatpush1.msra.mxu0 0.0
  %710 = vmatprep.subr.mxu0 0.0
  %711 = vmatpush1.msra.mxu0 0.0
  %712 = vmatprep.subr.mxu0 0.0
  %713 = vmatpush1.msra.mxu0 0.0
  %714 = vmatprep.subr.mxu0 0.0
  %715 = vmatpush1.msra.mxu0 0.0
  %716 = vmatprep.subr.mxu0 0.0
  %717 = vmatpush1.msra.mxu0 0.0
  %718 = vmatprep.subr.mxu0 0.0
  %719 = vmatpush1.msra.mxu0 0.0
  %720 = vmatprep.subr.mxu0 0.0
  %721 = vmatpush1.msra.mxu0 %v179
  %722 = vmatprep.subr.mxu0 0.0
  %723 = vmatpush1.msra.mxu0 %v178
  %724 = vmatprep.subr.mxu0 0.0
  %725 = vmatpush1.msra.mxu0 %v177
  %726 = vmatprep.subr.mxu0 0.0
  %727 = vmatpush1.msra.mxu0 %v176
  %728 = vmatprep.subr.mxu0 0.0
  %729 = vmatpush2.msra.mxu0 0.0
  %730 = vmatprep.subr.mxu0 0.0
  %731 = vmatpush2.msra.mxu0 0.0
  %732 = vmatprep.subr.mxu0 0.0
  %733 = vmatpush2.msra.mxu0 0.0
  %734 = vmatprep.subr.mxu0 0.0
  %735 = vmatpush2.msra.mxu0 0.0
  %736 = vmatprep.subr.mxu0 0.0
  %737 = vmatpush2.msra.mxu0 0.0
  %738 = vmatprep.subr.mxu0 0.0
  %739 = vmatpush2.msra.mxu0 0.0
  %740 = vmatprep.subr.mxu0 0.0
  %741 = vmatpush2.msra.mxu0 0.0
  %742 = vmatprep.subr.mxu0 0.0
  %743 = vmatpush2.msra.mxu0 0.0
  %744 = vmatprep.subr.mxu0 0.0
  %745 = vmatpush2.msra.mxu0 0.0
  %746 = vmatprep.subr.mxu0 0.0
  %747 = vmatpush2.msra.mxu0 0.0
  %748 = vmatprep.subr.mxu0 0.0
  %749 = vmatpush2.msra.mxu0 0.0
  %750 = vmatprep.subr.mxu0 0.0
  %751 = vmatpush2.msra.mxu0 0.0
  %752 = vmatprep.subr.mxu0 0.0
  %753 = vmatpush2.msra.mxu0 0.0
  %754 = vmatprep.subr.mxu0 0.0
  %755 = vmatpush2.msra.mxu0 0.0
  %756 = vmatprep.subr.mxu0 0.0
  %757 = vmatpush2.msra.mxu0 0.0
  %758 = vmatprep.subr.mxu0 0.0
  %759 = vmatpush2.msra.mxu0 0.0
  %760 = vmatprep.mubr.f32.mxu0 0.0
  %761 = vmatmul.mubr.f32.gmra.mxu0 %v694
  %v762 = vpop.f32.mrf.mxu0
  %v763 = vadd.f32 0.0, %v762
  %v764 = vpop.f32.mrf.mxu0
  %765 = vdwg.mxu0
  %v766 = vadd.f32 %v163, %v763
  %v767 = vmul.f32 %v766, 0.5
  %v768 = vtanh.pop %v767
  %v769 = vadd.f32 %v768, 1.0
  %v770 = vmul.f32 %v769, 0.5
  %v771 = vadd.f32 %v763, %v266
  %773 = vrot.lane.b32.xlu0 %v771, 64
  %v774 = vpop.permute.xlu0 %773
  %v776 = vmul.f32 %v770, %v774
  %778 = vrot.lane.b32.xlu0 %v776, 64
  %v779 = vpop.permute.xlu0 %778
  %v781 = vadd.f32 %v163, %v779
  %v782 = vtanh.pop %v781
  %v783 = vsub.f32 1.0, %v770
  %785 = vrot.lane.b32.xlu0 %v782, 96
  %v786 = vpop.permute.xlu0 %785
  %v788 = vmul.f32 %v783, %v786
  %v789 = vmul.f32 %v770, %v690
  %v790 = vadd.f32 %v788, %v789
  %792 = vrot.lane.b32.xlu0 %v790, 96
  %v793 = vpop.permute.xlu0 %792
  %v794 = vsel %vm181, %v793, 0
  %796 = vmatprep.subr.mxu0 0.0
  %797 = vmatpush1.msra.mxu0 0.0
  %798 = vmatprep.subr.mxu0 0.0
  %799 = vmatpush1.msra.mxu0 0.0
  %800 = vmatprep.subr.mxu0 0.0
  %801 = vmatpush1.msra.mxu0 0.0
  %802 = vmatprep.subr.mxu0 0.0
  %803 = vmatpush1.msra.mxu0 0.0
  %804 = vmatprep.subr.mxu0 0.0
  %805 = vmatpush1.msra.mxu0 0.0
  %806 = vmatprep.subr.mxu0 0.0
  %807 = vmatpush1.msra.mxu0 0.0
  %808 = vmatprep.subr.mxu0 0.0
  %809 = vmatpush1.msra.mxu0 0.0
  %810 = vmatprep.subr.mxu0 0.0
  %811 = vmatpush1.msra.mxu0 0.0
  %812 = vmatprep.subr.mxu0 0.0
  %813 = vmatpush1.msra.mxu0 0.0
  %814 = vmatprep.subr.mxu0 0.0
  %815 = vmatpush1.msra.mxu0 0.0
  %816 = vmatprep.subr.mxu0 0.0
  %817 = vmatpush1.msra.mxu0 0.0
  %818 = vmatprep.subr.mxu0 0.0
  %819 = vmatpush1.msra.mxu0 0.0
  %820 = vmatprep.subr.mxu0 0.0
  %821 = vmatpush1.msra.mxu0 %v179
  %822 = vmatprep.subr.mxu0 0.0
  %823 = vmatpush1.msra.mxu0 %v178
  %824 = vmatprep.subr.mxu0 0.0
  %825 = vmatpush1.msra.mxu0 %v177
  %826 = vmatprep.subr.mxu0 0.0
  %827 = vmatpush1.msra.mxu0 %v176
  %828 = vmatprep.subr.mxu0 0.0
  %829 = vmatpush2.msra.mxu0 0.0
  %830 = vmatprep.subr.mxu0 0.0
  %831 = vmatpush2.msra.mxu0 0.0
  %832 = vmatprep.subr.mxu0 0.0
  %833 = vmatpush2.msra.mxu0 0.0
  %834 = vmatprep.subr.mxu0 0.0
  %835 = vmatpush2.msra.mxu0 0.0
  %836 = vmatprep.subr.mxu0 0.0
  %837 = vmatpush2.msra.mxu0 0.0
  %838 = vmatprep.subr.mxu0 0.0
  %839 = vmatpush2.msra.mxu0 0.0
  %840 = vmatprep.subr.mxu0 0.0
  %841 = vmatpush2.msra.mxu0 0.0
  %842 = vmatprep.subr.mxu0 0.0
  %843 = vmatpush2.msra.mxu0 0.0
  %844 = vmatprep.subr.mxu0 0.0
  %845 = vmatpush2.msra.mxu0 0.0
  %846 = vmatprep.subr.mxu0 0.0
  %847 = vmatpush2.msra.mxu0 0.0
  %848 = vmatprep.subr.mxu0 0.0
  %849 = vmatpush2.msra.mxu0 0.0
  %850 = vmatprep.subr.mxu0 0.0
  %851 = vmatpush2.msra.mxu0 0.0
  %852 = vmatprep.subr.mxu0 0.0
  %853 = vmatpush2.msra.mxu0 0.0
  %854 = vmatprep.subr.mxu0 0.0
  %855 = vmatpush2.msra.mxu0 0.0
  %856 = vmatprep.subr.mxu0 0.0
  %857 = vmatpush2.msra.mxu0 0.0
  %858 = vmatprep.subr.mxu0 0.0
  %859 = vmatpush2.msra.mxu0 0.0
  %860 = vmatprep.mubr.f32.mxu0 0.0
  %861 = vmatmul.mubr.f32.gmra.mxu0 %v794
  %v862 = vpop.f32.mrf.mxu0
  %v863 = vadd.f32 0.0, %v862
  %v864 = vpop.f32.mrf.mxu0
  %865 = vdwg.mxu0
  %v866 = vadd.f32 %v168, %v863
  %v867 = vmul.f32 %v866, 0.5
  %v868 = vtanh.pop %v867
  %v869 = vadd.f32 %v868, 1.0
  %v870 = vmul.f32 %v869, 0.5
  %v871 = vadd.f32 %v863, %v266
  %873 = vrot.lane.b32.xlu0 %v871, 64
  %v874 = vpop.permute.xlu0 %873
  %v876 = vmul.f32 %v870, %v874
  %878 = vrot.lane.b32.xlu0 %v876, 64
  %v879 = vpop.permute.xlu0 %878
  %v881 = vadd.f32 %v168, %v879
  %v882 = vtanh.pop %v881
  %v883 = vsub.f32 1.0, %v870
  %885 = vrot.lane.b32.xlu0 %v882, 96
  %v886 = vpop.permute.xlu0 %885
  %v888 = vmul.f32 %v883, %v886
  %v889 = vmul.f32 %v870, %v790
  %v890 = vadd.f32 %v888, %v889
  %892 = vrot.lane.b32.xlu0 %v890, 96
  %v893 = vpop.permute.xlu0 %892
  %v894 = vsel %vm181, %v893, 0
  %896 = vmatprep.subr.mxu0 0.0
  %897 = vmatpush1.msra.mxu0 0.0
  %898 = vmatprep.subr.mxu0 0.0
  %899 = vmatpush1.msra.mxu0 0.0
  %900 = vmatprep.subr.mxu0 0.0
  %901 = vmatpush1.msra.mxu0 0.0
  %902 = vmatprep.subr.mxu0 0.0
  %903 = vmatpush1.msra.mxu0 0.0
  %904 = vmatprep.subr.mxu0 0.0
  %905 = vmatpush1.msra.mxu0 0.0
  %906 = vmatprep.subr.mxu0 0.0
  %907 = vmatpush1.msra.mxu0 0.0
  %908 = vmatprep.subr.mxu0 0.0
  %909 = vmatpush1.msra.mxu0 0.0
  %910 = vmatprep.subr.mxu0 0.0
  %911 = vmatpush1.msra.mxu0 0.0
  %912 = vmatprep.subr.mxu0 0.0
  %913 = vmatpush1.msra.mxu0 0.0
  %914 = vmatprep.subr.mxu0 0.0
  %915 = vmatpush1.msra.mxu0 0.0
  %916 = vmatprep.subr.mxu0 0.0
  %917 = vmatpush1.msra.mxu0 0.0
  %918 = vmatprep.subr.mxu0 0.0
  %919 = vmatpush1.msra.mxu0 0.0
  %920 = vmatprep.subr.mxu0 0.0
  %921 = vmatpush1.msra.mxu0 %v179
  %922 = vmatprep.subr.mxu0 0.0
  %923 = vmatpush1.msra.mxu0 %v178
  %924 = vmatprep.subr.mxu0 0.0
  %925 = vmatpush1.msra.mxu0 %v177
  %926 = vmatprep.subr.mxu0 0.0
  %927 = vmatpush1.msra.mxu0 %v176
  %928 = vmatprep.subr.mxu0 0.0
  %929 = vmatpush2.msra.mxu0 0.0
  %930 = vmatprep.subr.mxu0 0.0
  %931 = vmatpush2.msra.mxu0 0.0
  %932 = vmatprep.subr.mxu0 0.0
  %933 = vmatpush2.msra.mxu0 0.0
  %934 = vmatprep.subr.mxu0 0.0
  %935 = vmatpush2.msra.mxu0 0.0
  %936 = vmatprep.subr.mxu0 0.0
  %937 = vmatpush2.msra.mxu0 0.0
  %938 = vmatprep.subr.mxu0 0.0
  %939 = vmatpush2.msra.mxu0 0.0
  %940 = vmatprep.subr.mxu0 0.0
  %941 = vmatpush2.msra.mxu0 0.0
  %942 = vmatprep.subr.mxu0 0.0
  %943 = vmatpush2.msra.mxu0 0.0
  %944 = vmatprep.subr.mxu0 0.0
  %945 = vmatpush2.msra.mxu0 0.0
  %946 = vmatprep.subr.mxu0 0.0
  %947 = vmatpush2.msra.mxu0 0.0
  %948 = vmatprep.subr.mxu0 0.0
  %949 = vmatpush2.msra.mxu0 0.0
  %950 = vmatprep.subr.mxu0 0.0
  %951 = vmatpush2.msra.mxu0 0.0
  %952 = vmatprep.subr.mxu0 0.0
  %953 = vmatpush2.msra.mxu0 0.0
  %954 = vmatprep.subr.mxu0 0.0
  %955 = vmatpush2.msra.mxu0 0.0
  %956 = vmatprep.subr.mxu0 0.0
  %957 = vmatpush2.msra.mxu0 0.0
  %958 = vmatprep.subr.mxu0 0.0
  %959 = vmatpush2.msra.mxu0 0.0
  %960 = vmatprep.mubr.f32.mxu0 0.0
  %961 = vmatmul.mubr.f32.gmra.mxu0 %v894
  %v962 = vpop.f32.mrf.mxu0
  %v963 = vadd.f32 0.0, %v962
  %v964 = vpop.f32.mrf.mxu0
  %965 = vdwg.mxu0
  %v966 = vadd.f32 %v173, %v963
  %v967 = vmul.f32 %v966, 0.5
  %v968 = vtanh.pop %v967
  %v969 = vadd.f32 %v968, 1.0
  %v970 = vmul.f32 %v969, 0.5
  %v971 = vadd.f32 %v963, %v266
  %973 = vrot.lane.b32.xlu0 %v971, 64
  %v974 = vpop.permute.xlu0 %973
  %v976 = vmul.f32 %v970, %v974
  %978 = vrot.lane.b32.xlu0 %v976, 64
  %v979 = vpop.permute.xlu0 %978
  %v981 = vadd.f32 %v173, %v979
  %v982 = vtanh.pop %v981
  %v983 = vsub.f32 1.0, %v970
  %985 = vrot.lane.b32.xlu0 %v982, 96
  %v986 = vpop.permute.xlu0 %985
  %v988 = vmul.f32 %v983, %v986
  %v989 = vmul.f32 %v970, %v890
  %v990 = vadd.f32 %v988, %v989
  %992 = vrot.lane.b32.xlu0 %v990, 96
  %v993 = vpop.permute.xlu0 %992
  %995 = vst.msk [vmem:[%s9] sm:$0xff] %vm181, %v993
  %v996 = vld [vmem:[%s4] sm:$0xff]
  %v997 = vld [vmem:[%s4 + $0x8] sm:$0xff]
  %v998 = vld [vmem:[%s4 + $0x10] sm:$0xff]
  %v999 = vld [vmem:[%s4 + $0x18] sm:$0xff]
  %v1000 = vlaneseq
  %v1001 = vshrl.u32 %v1000, 7
  %v1002 = vsub.s32 2, %v1001
  %v1003 = vrot.slane %v31, %v1002
  %v1004 = vsel %vm181, %v993, 0
  %1006 = vmatprep.subr.mxu0 0.0
  %1007 = vmatpush1.msra.mxu0 0.0
  %1008 = vmatprep.subr.mxu0 0.0
  %1009 = vmatpush1.msra.mxu0 0.0
  %1010 = vmatprep.subr.mxu0 0.0
  %1011 = vmatpush1.msra.mxu0 0.0
  %1012 = vmatprep.subr.mxu0 0.0
  %1013 = vmatpush1.msra.mxu0 0.0
  %1014 = vmatprep.subr.mxu0 0.0
  %1015 = vmatpush1.msra.mxu0 0.0
  %1016 = vmatprep.subr.mxu0 0.0
  %1017 = vmatpush1.msra.mxu0 0.0
  %1018 = vmatprep.subr.mxu0 0.0
  %1019 = vmatpush1.msra.mxu0 0.0
  %1020 = vmatprep.subr.mxu0 0.0
  %1021 = vmatpush1.msra.mxu0 0.0
  %1022 = vmatprep.subr.mxu0 0.0
  %1023 = vmatpush1.msra.mxu0 0.0
  %1024 = vmatprep.subr.mxu0 0.0
  %1025 = vmatpush1.msra.mxu0 0.0
  %1026 = vmatprep.subr.mxu0 0.0
  %1027 = vmatpush1.msra.mxu0 0.0
  %1028 = vmatprep.subr.mxu0 0.0
  %1029 = vmatpush1.msra.mxu0 0.0
  %1030 = vmatprep.subr.mxu0 0.0
  %1031 = vmatpush1.msra.mxu0 %v999
  %1032 = vmatprep.subr.mxu0 0.0
  %1033 = vmatpush1.msra.mxu0 %v998
  %1034 = vmatprep.subr.mxu0 0.0
  %1035 = vmatpush1.msra.mxu0 %v997
  %1036 = vmatprep.subr.mxu0 0.0
  %1037 = vmatpush1.msra.mxu0 %v996
  %1038 = vmatprep.subr.mxu0 0.0
  %1039 = vmatpush2.msra.mxu0 0.0
  %1040 = vmatprep.subr.mxu0 0.0
  %1041 = vmatpush2.msra.mxu0 0.0
  %1042 = vmatprep.subr.mxu0 0.0
  %1043 = vmatpush2.msra.mxu0 0.0
  %1044 = vmatprep.subr.mxu0 0.0
  %1045 = vmatpush2.msra.mxu0 0.0
  %1046 = vmatprep.subr.mxu0 0.0
  %1047 = vmatpush2.msra.mxu0 0.0
  %1048 = vmatprep.subr.mxu0 0.0
  %1049 = vmatpush2.msra.mxu0 0.0
  %1050 = vmatprep.subr.mxu0 0.0
  %1051 = vmatpush2.msra.mxu0 0.0
  %1052 = vmatprep.subr.mxu0 0.0
  %1053 = vmatpush2.msra.mxu0 0.0
  %1054 = vmatprep.subr.mxu0 0.0
  %1055 = vmatpush2.msra.mxu0 0.0
  %1056 = vmatprep.subr.mxu0 0.0
  %1057 = vmatpush2.msra.mxu0 0.0
  %1058 = vmatprep.subr.mxu0 0.0
  %1059 = vmatpush2.msra.mxu0 0.0
  %1060 = vmatprep.subr.mxu0 0.0
  %1061 = vmatpush2.msra.mxu0 0.0
  %1062 = vmatprep.subr.mxu0 0.0
  %1063 = vmatpush2.msra.mxu0 0.0
  %1064 = vmatprep.subr.mxu0 0.0
  %1065 = vmatpush2.msra.mxu0 0.0
  %1066 = vmatprep.subr.mxu0 0.0
  %1067 = vmatpush2.msra.mxu0 0.0
  %1068 = vmatprep.subr.mxu0 0.0
  %1069 = vmatpush2.msra.mxu0 0.0
  %1070 = vmatprep.mubr.f32.mxu0 0.0
  %1071 = vmatmul.mubr.f32.gmra.mxu0 %v294
  %v1072 = vpop.f32.mrf.mxu0
  %v1073 = vadd.f32 %v1003, %v1072
  %v1074 = vpop.f32.mrf.mxu0
  %1075 = vmatprep.mubr.f32.mxu0 0.0
  %1076 = vmatmul.mubr.f32.gmra.mxu0 %v394
  %v1077 = vpop.f32.mrf.mxu0
  %v1078 = vadd.f32 %v1003, %v1077
  %v1079 = vpop.f32.mrf.mxu0
  %1080 = vmatprep.mubr.f32.mxu0 0.0
  %1081 = vmatmul.mubr.f32.gmra.mxu0 %v494
  %v1082 = vpop.f32.mrf.mxu0
  %v1083 = vadd.f32 %v1003, %v1082
  %v1084 = vpop.f32.mrf.mxu0
  %1085 = vmatprep.mubr.f32.mxu0 0.0
  %1086 = vmatmul.mubr.f32.gmra.mxu0 %v594
  %v1087 = vpop.f32.mrf.mxu0
  %v1088 = vadd.f32 %v1003, %v1087
  %v1089 = vpop.f32.mrf.mxu0
  %1090 = vmatprep.mubr.f32.mxu0 0.0
  %1091 = vmatmul.mubr.f32.gmra.mxu0 %v694
  %v1092 = vpop.f32.mrf.mxu0
  %v1093 = vadd.f32 %v1003, %v1092
  %v1094 = vpop.f32.mrf.mxu0
  %1095 = vmatprep.mubr.f32.mxu0 0.0
  %1096 = vmatmul.mubr.f32.gmra.mxu0 %v794
  %v1097 = vpop.f32.mrf.mxu0
  %v1098 = vadd.f32 %v1003, %v1097
  %v1099 = vpop.f32.mrf.mxu0
  %1100 = vmatprep.mubr.f32.mxu0 0.0
  %1101 = vmatmul.mubr.f32.gmra.mxu0 %v894
  %v1102 = vpop.f32.mrf.mxu0
  %v1103 = vadd.f32 %v1003, %v1102
  %v1104 = vpop.f32.mrf.mxu0
  %1105 = vmatprep.mubr.f32.mxu0 0.0
  %1106 = vmatmul.mubr.f32.gmra.mxu0 %v1004
  %v1107 = vpop.f32.mrf.mxu0
  %v1108 = vadd.f32 %v1003, %v1107
  %v1109 = vpop.f32.mrf.mxu0
  %1110 = vdwg.mxu0
  %v1111 = vtanh.pop %v1073
  %v1112 = vtanh.pop %v1078
  %v1113 = vtanh.pop %v1083
  %v1114 = vtanh.pop %v1088
  %v1115 = vtanh.pop %v1093
  %v1116 = vtanh.pop %v1098
  %v1117 = vtanh.pop %v1103
  %v1118 = vtanh.pop %v1108
  %v1119 = vld [vmem:[%s5] sm:$0xff]
  %v1120 = vld [vmem:[%s5 + $0x8] sm:$0xff]
  %v1121 = vld [vmem:[%s5 + $0x10] sm:$0xff]
  %v1122 = vld [vmem:[%s5 + $0x18] sm:$0xff]
  %v1123 = vlaneseq
  %v1124 = vshrl.u32 %v1123, 7
  %v1125 = vsub.s32 3, %v1124
  %v1126 = vrot.slane %v31, %v1125
  %v1128 = vsel %vm181, %v1111, 0
  %v1131 = vsel %vm181, %v1112, 0
  %v1134 = vsel %vm181, %v1113, 0
  %v1137 = vsel %vm181, %v1114, 0
  %v1140 = vsel %vm181, %v1115, 0
  %v1143 = vsel %vm181, %v1116, 0
  %v1146 = vsel %vm181, %v1117, 0
  %v1149 = vsel %vm181, %v1118, 0
  %1151 = vmatprep.subr.mxu0 0.0
  %1152 = vmatpush1.msra.mxu0 0.0
  %1153 = vmatprep.subr.mxu0 0.0
  %1154 = vmatpush1.msra.mxu0 0.0
  %1155 = vmatprep.subr.mxu0 0.0
  %1156 = vmatpush1.msra.mxu0 0.0
  %1157 = vmatprep.subr.mxu0 0.0
  %1158 = vmatpush1.msra.mxu0 0.0
  %1159 = vmatprep.subr.mxu0 0.0
  %1160 = vmatpush1.msra.mxu0 0.0
  %1161 = vmatprep.subr.mxu0 0.0
  %1162 = vmatpush1.msra.mxu0 0.0
  %1163 = vmatprep.subr.mxu0 0.0
  %1164 = vmatpush1.msra.mxu0 0.0
  %1165 = vmatprep.subr.mxu0 0.0
  %1166 = vmatpush1.msra.mxu0 0.0
  %1167 = vmatprep.subr.mxu0 0.0
  %1168 = vmatpush1.msra.mxu0 0.0
  %1169 = vmatprep.subr.mxu0 0.0
  %1170 = vmatpush1.msra.mxu0 0.0
  %1171 = vmatprep.subr.mxu0 0.0
  %1172 = vmatpush1.msra.mxu0 0.0
  %1173 = vmatprep.subr.mxu0 0.0
  %1174 = vmatpush1.msra.mxu0 0.0
  %1175 = vmatprep.subr.mxu0 0.0
  %1176 = vmatpush1.msra.mxu0 %v1122
  %1177 = vmatprep.subr.mxu0 0.0
  %1178 = vmatpush1.msra.mxu0 %v1121
  %1179 = vmatprep.subr.mxu0 0.0
  %1180 = vmatpush1.msra.mxu0 %v1120
  %1181 = vmatprep.subr.mxu0 0.0
  %1182 = vmatpush1.msra.mxu0 %v1119
  %1183 = vmatprep.subr.mxu0 0.0
  %1184 = vmatpush2.msra.mxu0 0.0
  %1185 = vmatprep.subr.mxu0 0.0
  %1186 = vmatpush2.msra.mxu0 0.0
  %1187 = vmatprep.subr.mxu0 0.0
  %1188 = vmatpush2.msra.mxu0 0.0
  %1189 = vmatprep.subr.mxu0 0.0
  %1190 = vmatpush2.msra.mxu0 0.0
  %1191 = vmatprep.subr.mxu0 0.0
  %1192 = vmatpush2.msra.mxu0 0.0
  %1193 = vmatprep.subr.mxu0 0.0
  %1194 = vmatpush2.msra.mxu0 0.0
  %1195 = vmatprep.subr.mxu0 0.0
  %1196 = vmatpush2.msra.mxu0 0.0
  %1197 = vmatprep.subr.mxu0 0.0
  %1198 = vmatpush2.msra.mxu0 0.0
  %1199 = vmatprep.subr.mxu0 0.0
  %1200 = vmatpush2.msra.mxu0 0.0
  %1201 = vmatprep.subr.mxu0 0.0
  %1202 = vmatpush2.msra.mxu0 0.0
  %1203 = vmatprep.subr.mxu0 0.0
  %1204 = vmatpush2.msra.mxu0 0.0
  %1205 = vmatprep.subr.mxu0 0.0
  %1206 = vmatpush2.msra.mxu0 0.0
  %1207 = vmatprep.subr.mxu0 0.0
  %1208 = vmatpush2.msra.mxu0 0.0
  %1209 = vmatprep.subr.mxu0 0.0
  %1210 = vmatpush2.msra.mxu0 0.0
  %1211 = vmatprep.subr.mxu0 0.0
  %1212 = vmatpush2.msra.mxu0 0.0
  %1213 = vmatprep.subr.mxu0 0.0
  %1214 = vmatpush2.msra.mxu0 0.0
  %1215 = vmatprep.mubr.f32.mxu0 0.0
  %1216 = vmatmul.mubr.f32.gmra.mxu0 %v1128
  %v1217 = vpop.f32.mrf.mxu0
  %v1218 = vadd.f32 %v1126, %v1217
  %v1219 = vpop.f32.mrf.mxu0
  %1220 = vmatprep.mubr.f32.mxu0 0.0
  %1221 = vmatmul.mubr.f32.gmra.mxu0 %v1131
  %v1222 = vpop.f32.mrf.mxu0
  %v1223 = vadd.f32 %v1126, %v1222
  %v1224 = vpop.f32.mrf.mxu0
  %1225 = vmatprep.mubr.f32.mxu0 0.0
  %1226 = vmatmul.mubr.f32.gmra.mxu0 %v1134
  %v1227 = vpop.f32.mrf.mxu0
  %v1228 = vadd.f32 %v1126, %v1227
  %v1229 = vpop.f32.mrf.mxu0
  %1230 = vmatprep.mubr.f32.mxu0 0.0
  %1231 = vmatmul.mubr.f32.gmra.mxu0 %v1137
  %v1232 = vpop.f32.mrf.mxu0
  %v1233 = vadd.f32 %v1126, %v1232
  %v1234 = vpop.f32.mrf.mxu0
  %1235 = vmatprep.mubr.f32.mxu0 0.0
  %1236 = vmatmul.mubr.f32.gmra.mxu0 %v1140
  %v1237 = vpop.f32.mrf.mxu0
  %v1238 = vadd.f32 %v1126, %v1237
  %v1239 = vpop.f32.mrf.mxu0
  %1240 = vmatprep.mubr.f32.mxu0 0.0
  %1241 = vmatmul.mubr.f32.gmra.mxu0 %v1143
  %v1242 = vpop.f32.mrf.mxu0
  %v1243 = vadd.f32 %v1126, %v1242
  %v1244 = vpop.f32.mrf.mxu0
  %1245 = vmatprep.mubr.f32.mxu0 0.0
  %1246 = vmatmul.mubr.f32.gmra.mxu0 %v1146
  %v1247 = vpop.f32.mrf.mxu0
  %v1248 = vadd.f32 %v1126, %v1247
  %v1249 = vpop.f32.mrf.mxu0
  %1250 = vmatprep.mubr.f32.mxu0 0.0
  %1251 = vmatmul.mubr.f32.gmra.mxu0 %v1149
  %v1252 = vpop.f32.mrf.mxu0
  %v1253 = vadd.f32 %v1126, %v1252
  %v1254 = vpop.f32.mrf.mxu0
  %1255 = vdwg.mxu0
  %v1256 = vtanh.pop %v1218
  %v1257 = vtanh.pop %v1223
  %v1258 = vtanh.pop %v1228
  %v1259 = vtanh.pop %v1233
  %v1260 = vtanh.pop %v1238
  %v1261 = vtanh.pop %v1243
  %v1262 = vtanh.pop %v1248
  %v1263 = vtanh.pop %v1253
  %v1264 = vld [vmem:[%s6] sm:$0xff]
  %v1265 = vld [vmem:[%s6 + $0x8] sm:$0xff]
  %v1266 = vld [vmem:[%s6 + $0x10] sm:$0xff]
  %v1267 = vld [vmem:[%s6 + $0x18] sm:$0xff]
  %v1268 = vld [vmem:[%s6 + $0x20] sm:$0xff]
  %v1269 = vld [vmem:[%s6 + $0x28] sm:$0xff]
  %v1270 = vld [vmem:[%s6 + $0x30] sm:$0xff]
  %v1271 = vld [vmem:[%s6 + $0x38] sm:$0xff]
  %v1272 = vlaneseq
  %v1273 = vshrl.u32 %v1272, 7
  %v1274 = vsub.s32 4, %v1273
  %v1275 = vrot.slane %v31, %v1274
  %vm1276 = vcmask 523264
  %v1278 = vsel %vm1276, %v1256, 0
  %v1281 = vsel %vm1276, %v1257, 0
  %v1284 = vsel %vm1276, %v1258, 0
  %v1287 = vsel %vm1276, %v1259, 0
  %v1290 = vsel %vm1276, %v1260, 0
  %v1293 = vsel %vm1276, %v1261, 0
  %v1296 = vsel %vm1276, %v1262, 0
  %v1299 = vsel %vm1276, %v1263, 0
  %1301 = vmatprep.subr.mxu0 0.0
  %1302 = vmatpush1.msra.mxu0 0.0
  %1303 = vmatprep.subr.mxu0 0.0
  %1304 = vmatpush1.msra.mxu0 0.0
  %1305 = vmatprep.subr.mxu0 0.0
  %1306 = vmatpush1.msra.mxu0 0.0
  %1307 = vmatprep.subr.mxu0 0.0
  %1308 = vmatpush1.msra.mxu0 0.0
  %1309 = vmatprep.subr.mxu0 0.0
  %1310 = vmatpush1.msra.mxu0 0.0
  %1311 = vmatprep.subr.mxu0 0.0
  %1312 = vmatpush1.msra.mxu0 0.0
  %1313 = vmatprep.subr.mxu0 0.0
  %1314 = vmatpush1.msra.mxu0 0.0
  %1315 = vmatprep.subr.mxu0 0.0
  %1316 = vmatpush1.msra.mxu0 0.0
  %1317 = vmatprep.subr.mxu0 0.0
  %1318 = vmatpush1.msra.mxu0 %v1271
  %1319 = vmatprep.subr.mxu0 0.0
  %1320 = vmatpush1.msra.mxu0 %v1270
  %1321 = vmatprep.subr.mxu0 0.0
  %1322 = vmatpush1.msra.mxu0 %v1269
  %1323 = vmatprep.subr.mxu0 0.0
  %1324 = vmatpush1.msra.mxu0 %v1268
  %1325 = vmatprep.subr.mxu0 0.0
  %1326 = vmatpush1.msra.mxu0 %v1267
  %1327 = vmatprep.subr.mxu0 0.0
  %1328 = vmatpush1.msra.mxu0 %v1266
  %1329 = vmatprep.subr.mxu0 0.0
  %1330 = vmatpush1.msra.mxu0 %v1265
  %1331 = vmatprep.subr.mxu0 0.0
  %1332 = vmatpush1.msra.mxu0 %v1264
  %1333 = vmatprep.subr.mxu0 0.0
  %1334 = vmatpush2.msra.mxu0 0.0
  %1335 = vmatprep.subr.mxu0 0.0
  %1336 = vmatpush2.msra.mxu0 0.0
  %1337 = vmatprep.subr.mxu0 0.0
  %1338 = vmatpush2.msra.mxu0 0.0
  %1339 = vmatprep.subr.mxu0 0.0
  %1340 = vmatpush2.msra.mxu0 0.0
  %1341 = vmatprep.subr.mxu0 0.0
  %1342 = vmatpush2.msra.mxu0 0.0
  %1343 = vmatprep.subr.mxu0 0.0
  %1344 = vmatpush2.msra.mxu0 0.0
  %1345 = vmatprep.subr.mxu0 0.0
  %1346 = vmatpush2.msra.mxu0 0.0
  %1347 = vmatprep.subr.mxu0 0.0
  %1348 = vmatpush2.msra.mxu0 0.0
  %1349 = vmatprep.subr.mxu0 0.0
  %1350 = vmatpush2.msra.mxu0 0.0
  %1351 = vmatprep.subr.mxu0 0.0
  %1352 = vmatpush2.msra.mxu0 0.0
  %1353 = vmatprep.subr.mxu0 0.0
  %1354 = vmatpush2.msra.mxu0 0.0
  %1355 = vmatprep.subr.mxu0 0.0
  %1356 = vmatpush2.msra.mxu0 0.0
  %1357 = vmatprep.subr.mxu0 0.0
  %1358 = vmatpush2.msra.mxu0 0.0
  %1359 = vmatprep.subr.mxu0 0.0
  %1360 = vmatpush2.msra.mxu0 0.0
  %1361 = vmatprep.subr.mxu0 0.0
  %1362 = vmatpush2.msra.mxu0 0.0
  %1363 = vmatprep.subr.mxu0 0.0
  %1364 = vmatpush2.msra.mxu0 0.0
  %1365 = vmatprep.mubr.f32.mxu0 0.0
  %1366 = vmatmul.mubr.f32.gmra.mxu0 %v1278
  %v1367 = vpop.f32.mrf.mxu0
  %v1368 = vadd.f32 %v1275, %v1367
  %v1369 = vpop.f32.mrf.mxu0
  %1370 = vmatprep.mubr.f32.mxu0 0.0
  %1371 = vmatmul.mubr.f32.gmra.mxu0 %v1281
  %v1372 = vpop.f32.mrf.mxu0
  %v1373 = vadd.f32 %v1275, %v1372
  %v1374 = vpop.f32.mrf.mxu0
  %1375 = vmatprep.mubr.f32.mxu0 0.0
  %1376 = vmatmul.mubr.f32.gmra.mxu0 %v1284
  %v1377 = vpop.f32.mrf.mxu0
  %v1378 = vadd.f32 %v1275, %v1377
  %v1379 = vpop.f32.mrf.mxu0
  %1380 = vmatprep.mubr.f32.mxu0 0.0
  %1381 = vmatmul.mubr.f32.gmra.mxu0 %v1287
  %v1382 = vpop.f32.mrf.mxu0
  %v1383 = vadd.f32 %v1275, %v1382
  %v1384 = vpop.f32.mrf.mxu0
  %1385 = vmatprep.mubr.f32.mxu0 0.0
  %1386 = vmatmul.mubr.f32.gmra.mxu0 %v1290
  %v1387 = vpop.f32.mrf.mxu0
  %v1388 = vadd.f32 %v1275, %v1387
  %v1389 = vpop.f32.mrf.mxu0
  %1390 = vmatprep.mubr.f32.mxu0 0.0
  %1391 = vmatmul.mubr.f32.gmra.mxu0 %v1293
  %v1392 = vpop.f32.mrf.mxu0
  %v1393 = vadd.f32 %v1275, %v1392
  %v1394 = vpop.f32.mrf.mxu0
  %1395 = vmatprep.mubr.f32.mxu0 0.0
  %1396 = vmatmul.mubr.f32.gmra.mxu0 %v1296
  %v1397 = vpop.f32.mrf.mxu0
  %v1398 = vadd.f32 %v1275, %v1397
  %v1399 = vpop.f32.mrf.mxu0
  %1400 = vmatprep.mubr.f32.mxu0 0.0
  %1401 = vmatmul.mubr.f32.gmra.mxu0 %v1299
  %v1402 = vpop.f32.mrf.mxu0
  %v1403 = vadd.f32 %v1275, %v1402
  %v1404 = vpop.f32.mrf.mxu0
  %1405 = vdwg.mxu0
  %v1406 = vlaneseq
  %v1407 = vand.u32 %v1406, 127
  %vm1408 = vcmp.lt.s32.totalorder %v1407, 4
  %v1409 = vtanh.pop %v1368
  %v1410 = vtanh.pop %v1373
  %v1411 = vtanh.pop %v1378
  %v1412 = vtanh.pop %v1383
  %v1413 = vtanh.pop %v1388
  %v1414 = vtanh.pop %v1393
  %v1415 = vtanh.pop %v1398
  %v1416 = vtanh.pop %v1403
  %v1417 = vsel %vm1408, %v1409, %v1368
  %v1418 = vsel %vm1408, %v1410, %v1373
  %v1419 = vsel %vm1408, %v1411, %v1378
  %v1420 = vsel %vm1408, %v1412, %v1383
  %v1421 = vsel %vm1408, %v1413, %v1388
  %v1422 = vsel %vm1408, %v1414, %v1393
  %v1423 = vsel %vm1408, %v1415, %v1398
  %v1424 = vsel %vm1408, %v1416, %v1403
  %1425 = vst [vmem:[%s8] sm:$0xff] %v1417
  %1426 = vst [vmem:[%s8 + $0x8] sm:$0xff] %v1418
  %1427 = vst [vmem:[%s8 + $0x10] sm:$0xff] %v1419
  %1428 = vst [vmem:[%s8 + $0x18] sm:$0xff] %v1420
  %1429 = vst [vmem:[%s8 + $0x20] sm:$0xff] %v1421
  %1430 = vst [vmem:[%s8 + $0x28] sm:$0xff] %v1422
  %1431 = vst [vmem:[%s8 + $0x30] sm:$0xff] %v1423
  %1432 = vst [vmem:[%s8 + $0x38] sm:$0xff] %v1424
  // Predicated region
  $region34: #{actor_critic_forward.1} parent=0 // pred_check
    _
  $region35: #{actor_critic_forward.1} parent=0 // pred_check_branch
    %1434 = sbr.rel (0) target = $region37
  $region36: #{actor_critic_forward.1} parent=0 // pred_region
    _
  $region37: #{actor_critic_forward.1} parent=0 // pred_fallthru
    _
  // Predicated region
  $region38: #{actor_critic_forward.1} parent=0 // pred_check
    _
  $region39: #{actor_critic_forward.1} parent=0 // pred_check_branch
    %1436 = sbr.rel (0) target = $region41
  $region40: #{actor_critic_forward.1} parent=0 // pred_region
    _
  $region41: #{actor_critic_forward.1} parent=0 // pred_fallthru
    _
  // Predicated region
  $region42: #{actor_critic_forward.1} parent=0 // pred_check
    _
  $region43: #{actor_critic_forward.1} parent=0 // pred_check_branch
    %1438 = sbr.rel (0) target = $region45
  $region44: #{actor_critic_forward.1} parent=0 // pred_region
    _
  $region45: #{actor_critic_forward.1} parent=0 // pred_fallthru
    _
  // Predicated region
  $region46: #{actor_critic_forward.1} parent=0 // pred_check
    _
  $region47: #{actor_critic_forward.1} parent=0 // pred_check_branch
    %1440 = sbr.rel (0) target = $region49
  $region48: #{actor_critic_forward.1} parent=0 // pred_region
    _
  $region49: #{actor_critic_forward.1} parent=0 // pred_fallthru
    _

</llo_original>
